<compile_context>
chip_gen: v5e
topology: v5e:2x2
jax: 0.10.0
libtpu: 0.0.40
codegen_flags: <defaults>
</compile_context>

<pallas_src>
import functools

import numpy as np
import jax
import jax.numpy as jnp
from jax.experimental import pallas as pl
from jax.experimental.pallas import tpu as pltpu


# ----------------------------------------------------------------------------
# Fused Pallas kernel: conv1+ReLU -> conv2+ReLU -> conv3+ReLU -> flatten ->
#                      linear+ReLU -> linear, all in one kernel invocation.
# ----------------------------------------------------------------------------
def _fused_cnn_kernel(x_ref, w1_ref, bz1_ref, w2_ref, bz2_ref, w3_ref, bz3_ref,
                      w4_ref, b4_ref, w5_ref, b5_ref, out_ref, a1_ref, a2_ref,
                      *, batch):
    f32 = jnp.float32

    def mm(a, b):
        # Default MXU precision, f32 accumulation.
        return jnp.dot(a, b, preferred_element_type=f32)

    def mm_hi(a, b):
        # The two tiny linears run at HIGHEST precision (negligible cost).
        return jnp.dot(a, b, preferred_element_type=f32,
                       precision=jax.lax.Precision.HIGHEST)

    # Zero both activation scratches once: the rows never overwritten below are
    # exactly the H-padding halo rows the next conv reads.
    a1_ref[...] = jnp.zeros(a1_ref.shape, f32)
    a2_ref[...] = jnp.zeros(a2_ref.shape, f32)

    bz1 = bz1_ref[...]            # [1, 128]  conv1 bias tiled over W (lane-dense)
    bz2 = bz2_ref[...]            # [1, 128]
    bz3 = bz3_ref[...]            # [1, 64]

    # ---- conv1: 4 -> 8, 3x3, stride 1, pad 1, + fused ReLU -------------------
    # x_ref rows: n*18 + p, p = padded H index (p=0,17 zero); lanes = w*4 + c.
    # Per image: 3 matmuls [16,64]x[64,128]; one lane-dense [16,128] store.
    for n in range(batch):
        src = n * 18
        acc = mm(x_ref[src + 0:src + 16, :], w1_ref[0])
        acc += mm(x_ref[src + 1:src + 17, :], w1_ref[1])
        acc += mm(x_ref[src + 2:src + 18, :], w1_ref[2])
        a1_ref[src + 1:src + 17, :] = jnp.maximum(acc + bz1, 0.0)

    # ---- conv2: 8 -> 16, 3x3, stride 2, pad 1, + fused ReLU ------------------
    # H stride 2 = strided sublane read of the needed rows (no wasted compute,
    # no selector matmul); W stride / pad live in the banded RHS.
    # Per image: 3 matmuls [8,128]x[128,128]; one [8,128] store.
    for n in range(batch):
        src = n * 18
        dst = n * 10
        acc = mm(a1_ref[pl.ds(src + 0, 8, stride=2), :], w2_ref[0])
        acc += mm(a1_ref[pl.ds(src + 1, 8, stride=2), :], w2_ref[1])
        acc += mm(a1_ref[pl.ds(src + 2, 8, stride=2), :], w2_ref[2])
        a2_ref[dst + 1:dst + 9, :] = jnp.maximum(acc + bz2, 0.0)

    # ---- conv3: 16 -> 16, 3x3, stride 2, pad 1, + fused ReLU -----------------
    # Per image: 3 matmuls [4,128]x[128,64]; result kept in registers.
    feats = []
    for n in range(batch):
        src = n * 10
        acc = mm(a2_ref[pl.ds(src + 0, 4, stride=2), :], w3_ref[0])
        acc += mm(a2_ref[pl.ds(src + 1, 4, stride=2), :], w3_ref[1])
        acc += mm(a2_ref[pl.ds(src + 2, 4, stride=2), :], w3_ref[2])
        feats.append(jnp.maximum(acc + bz3, 0.0))        # [4, 64]  (h, w*16+c)

    # ---- Flatten + Linear(256->32) + ReLU, batched over images (M = batch) ---
    # Reshape-free flatten: one [batch,64]x[64,32] matmul per conv3 output row
    # h (w4 rows were permuted once in the wrapper to (h, w, c) order, so this
    # matches PyTorch's NCHW flatten exactly).
    h1 = b4_ref[...]                                     # [1, 32] -> broadcasts
    for h in range(4):
        lhs = jnp.concatenate([f[h:h + 1, :] for f in feats], axis=0)  # [batch,64]
        h1 = h1 + mm_hi(lhs, w4_ref[h])
    h1 = jnp.maximum(h1, 0.0)                            # [batch, 32]

    # ---- Linear(32->10): single batched matmul, single HBM store -------------
    out_ref[...] = mm_hi(h1, w5_ref[...]) + b5_ref[...]  # [batch, 10] logits


@jax.jit
def _fused_forward_impl(x_nchw, params):
    (w1b, bz1, w2b, bz2, w3b, bz3, w4r, b4r, w5t, b5r) = params
    n, c, h, w = x_nchw.shape
    assert (c, h, w) == (4, 16, 16)

    # One-time tiny entry relayout: NCHW -> lane-dense rows [N*18, W*C],
    # rows n*18+0 / n*18+17 are the zero H halo.
    x_rows = jnp.transpose(x_nchw, (0, 2, 3, 1)).reshape(n, h, w * c)
    x0p = jnp.pad(x_rows, ((0, 0), (1, 1), (0, 0))).reshape(n * (h + 2), w * c)

    inputs = (x0p, w1b, bz1, w2b, bz2, w3b, bz3, w4r, b4r, w5t, b5r)
    vmem = lambda: pl.BlockSpec(memory_space=pltpu.MemorySpace.VMEM)
    kernel = functools.partial(_fused_cnn_kernel, batch=n)

    # TODO(synk): for large batch on v7x, add a leading "parallel" grid axis over
    # batch blocks (2 TensorCores) and tile the batch dim in these BlockSpecs;
    # at N=2 a single program is cheaper on all generations.
    return pl.pallas_call(
        kernel,
        out_shape=jax.ShapeDtypeStruct((n, 10), jnp.float32),
        in_specs=[vmem() for _ in inputs],
        out_specs=vmem(),
        scratch_shapes=[
            pltpu.VMEM((n * 18, 128), jnp.float32),   # padded relu(conv1): rows=(n,h+1), lanes=w*8+c
            pltpu.VMEM((n * 10, 128), jnp.float32),   # padded relu(conv2): rows=(n,h+1), lanes=w*16+c
        ],
        cost_estimate=pl.CostEstimate(flops=800_000, transcendentals=0,
                                      bytes_accessed=500_000),
    )(*inputs)


# ----------------------------------------------------------------------------
# Parameter extraction / preprocessing (wrapper-side, done once on weights)
# ----------------------------------------------------------------------------
def _banded_rhs(w_oihw, w_in, w_out, stride):
    """[3, W_in*IC, W_out*OC] banded RHS: RHS[ki, wi*IC+ic, ow*OC+oc] =
    w[oc, ic, ki, kj] when wi == stride*ow + kj - 1 (pad=1), else 0.
    Folds the kj taps, the W stride and the W zero-padding of one conv into a
    single MXU RHS per kernel row ki."""
    w = np.asarray(w_oihw, np.float32)
    oc, ic = w.shape[0], w.shape[1]
    rhs = np.zeros((3, w_in * ic, w_out * oc), np.float32)
    for ki in range(3):
        for ow in range(w_out):
            for kj in range(3):
                wi = stride * ow + kj - 1
                if 0 <= wi < w_in:
                    rhs[ki, wi * ic:(wi + 1) * ic, ow * oc:(ow + 1) * oc] = \
                        w[:, :, ki, kj].T
    return jnp.asarray(rhs)


def _tiled_bias(b, w_out):
    # Bias replicated over W so it adds directly onto the lane-dense [*, W*OC] row.
    return jnp.asarray(np.tile(np.asarray(b, np.float32), w_out)[None, :])


def build_fused_params(blocks):
    kinds = [b[0] for b in blocks]
    assert kinds == ["conv", "relu", "conv", "relu", "conv", "relu",
                     "flatten", "linear", "relu", "linear"], kinds
    _, w1, b1, st1, pd1 = blocks[0]
    _, w2, b2, st2, pd2 = blocks[2]
    _, w3, b3, st3, pd3 = blocks[4]
    _, w4, b4 = blocks[7]
    _, w5, b5 = blocks[9]
    assert (st1, pd1, st2, pd2, st3, pd3) == (1, 1, 2, 1, 2, 1)
    assert w1.shape == (8, 4, 3, 3) and w2.shape == (16, 8, 3, 3)
    assert w3.shape == (16, 16, 3, 3) and w4.shape == (32, 256) and w5.shape == (10, 32)

    # First Linear weight as [h, w*16+c, out]: kernel feature order (h, w, c)
    # must equal PyTorch's NCHW flatten index c*16 + h*4 + w.
    w4r = jnp.asarray(
        np.transpose(np.asarray(w4, np.float32).reshape(32, 16, 4, 4),
                     (2, 3, 1, 0)).reshape(4, 64, 32))

    return (_banded_rhs(w1, 16, 16, 1), _tiled_bias(b1, 16),
            _banded_rhs(w2, 16, 8, 2), _tiled_bias(b2, 8),
            _banded_rhs(w3, 8, 4, 2), _tiled_bias(b3, 4),
            w4r, jnp.asarray(np.asarray(b4, np.float32)[None, :]),
            jnp.asarray(np.asarray(w5, np.float32).T),
            jnp.asarray(np.asarray(b5, np.float32)[None, :]))


def forward(blocks, spike):
    """Sequential forward like NIR2LavaDLNetwork.forward, fully fused into a
    single Pallas TPU kernel (same semantics as applying the blocks in order)."""
    params = build_fused_params(blocks)
    return _fused_forward_impl(spike, params)


# ----------------------------------------------------------------------------
# Pure-JAX reference (full f32 precision) for the correctness check
# ----------------------------------------------------------------------------
def forward_ref(blocks, x):
    for blk in blocks:
        kind = blk[0]
        if kind == "conv":
            _, w, b, stride, pad = blk
            x = jax.lax.conv_general_dilated(
                x, w, (stride, stride), ((pad, pad), (pad, pad)),
                dimension_numbers=("NCHW", "OIHW", "NCHW"),
                precision=jax.lax.Precision.HIGHEST,
            ) + b.reshape(1, -1, 1, 1)
        elif kind == "relu":
            x = jnp.maximum(x, 0.0)
        elif kind == "flatten":
            x = x.reshape(x.shape[0], -1)
        elif kind == "linear":
            _, w, b = blk
            x = jnp.dot(x, w.T, precision=jax.lax.Precision.HIGHEST) + b
        else:
            raise Exception("Unknown block type")
    return x


# ----------------------------------------------------------------------------
# Deterministic parameter construction (representative lava-dl CNN)
# ----------------------------------------------------------------------------
def make_blocks(key):
    def conv_params(k, oc, ic, ks):
        k1, k2 = jax.random.split(k)
        fan_in = ic * ks * ks
        w = jax.random.normal(k1, (oc, ic, ks, ks), jnp.float32) / np.sqrt(fan_in)
        b = 0.01 * jax.random.normal(k2, (oc,), jnp.float32)
        return w, b

    def lin_params(k, out_f, in_f):
        k1, k2 = jax.random.split(k)
        w = jax.random.normal(k1, (out_f, in_f), jnp.float32) / np.sqrt(in_f)
        b = 0.01 * jax.random.normal(k2, (out_f,), jnp.float32)
        return w, b

    k1, k2, k3, k4, k5 = jax.random.split(key, 5)
    w1, b1 = conv_params(k1, 8, 4, 3)
    w2, b2 = conv_params(k2, 16, 8, 3)
    w3, b3 = conv_params(k3, 16, 16, 3)
    w4, b4 = lin_params(k4, 32, 16 * 4 * 4)
    w5, b5 = lin_params(k5, 10, 32)

    return [
        ("conv", w1, b1, 1, 1),
        ("relu",),
        ("conv", w2, b2, 2, 1),
        ("relu",),
        ("conv", w3, b3, 2, 1),
        ("relu",),
        ("flatten",),
        ("linear", w4, b4),
        ("relu",),
        ("linear", w5, b5),
    ]


if __name__ == "__main__":
    root = jax.random.PRNGKey(0)
    k_in, k_params = jax.random.split(root)

    x = jax.random.normal(k_in, (2, 4, 16, 16), jnp.float32)  # NCHW, like torch
    blocks = make_blocks(k_params)

    out = jax.block_until_ready(forward(blocks, x))
    ref = jax.block_until_ready(forward_ref(blocks, x))

    assert out.shape == (2, 10) and out.dtype == jnp.float32
    # Tolerance is loose on purpose: the convs use the MXU's default (fast)
    # precision per the perf guidance, while the reference runs all 5 layers
    # at Precision.HIGHEST.
    np.testing.assert_allclose(np.asarray(out), np.asarray(ref), rtol=5e-2, atol=5e-2)

    print("KERNEL_OK")
</pallas_src>

<mosaic_0001>
module attributes {stable_mosaic.version = 11 : i64} {
  func.func @_fused_cnn_kernel(%arg0: memref<36x64xf32, #tpu.memory_space<vmem>>, %arg1: memref<3x64x128xf32, #tpu.memory_space<vmem>>, %arg2: memref<1x128xf32, #tpu.memory_space<vmem>>, %arg3: memref<3x128x128xf32, #tpu.memory_space<vmem>>, %arg4: memref<1x128xf32, #tpu.memory_space<vmem>>, %arg5: memref<3x128x64xf32, #tpu.memory_space<vmem>>, %arg6: memref<1x64xf32, #tpu.memory_space<vmem>>, %arg7: memref<4x64x32xf32, #tpu.memory_space<vmem>>, %arg8: memref<1x32xf32, #tpu.memory_space<vmem>>, %arg9: memref<32x10xf32, #tpu.memory_space<vmem>>, %arg10: memref<1x10xf32, #tpu.memory_space<vmem>>, %arg11: memref<2x10xf32, #tpu.memory_space<vmem>>, %arg12: memref<36x128xf32, #tpu.memory_space<vmem>>, %arg13: memref<20x128xf32, #tpu.memory_space<vmem>>) attributes {dimension_semantics = [], scalar_prefetch = 0 : i64, scratch_operands = 2 : i64, tpu.core_type = #tpu.core_type<tc>} {
    %cst = arith.constant 0.000000e+00 : f32
    %0 = vector.broadcast %cst : f32 to vector<36x128xf32>
    %c0 = arith.constant 0 : index
    %c0_0 = arith.constant 0 : index
    %1 = vector.load %arg12[%c0, %c0_0] : memref<36x128xf32, #tpu.memory_space<vmem>>, vector<36x128xf32>
    tpu.vector_store %arg12[%c0, %c0_0], %0 {strides = array<i32>} : memref<36x128xf32, #tpu.memory_space<vmem>>, vector<36x128xf32>,
    %cst_1 = arith.constant 0.000000e+00 : f32
    %2 = vector.broadcast %cst_1 : f32 to vector<20x128xf32>
    %c0_2 = arith.constant 0 : index
    %c0_3 = arith.constant 0 : index
    %3 = vector.load %arg13[%c0_2, %c0_3] : memref<20x128xf32, #tpu.memory_space<vmem>>, vector<20x128xf32>
    tpu.vector_store %arg13[%c0_2, %c0_3], %2 {strides = array<i32>} : memref<20x128xf32, #tpu.memory_space<vmem>>, vector<20x128xf32>,
    %c0_4 = arith.constant 0 : index
    %c0_5 = arith.constant 0 : index
    %4 = vector.load %arg2[%c0_4, %c0_5] : memref<1x128xf32, #tpu.memory_space<vmem>>, vector<1x128xf32>
    %c0_6 = arith.constant 0 : index
    %c0_7 = arith.constant 0 : index
    %5 = vector.load %arg4[%c0_6, %c0_7] : memref<1x128xf32, #tpu.memory_space<vmem>>, vector<1x128xf32>
    %c0_8 = arith.constant 0 : index
    %c0_9 = arith.constant 0 : index
    %6 = vector.load %arg6[%c0_8, %c0_9] : memref<1x64xf32, #tpu.memory_space<vmem>>, vector<1x64xf32>
    %c0_10 = arith.constant 0 : index
    %c0_11 = arith.constant 0 : index
    %7 = vector.load %arg0[%c0_10, %c0_11] : memref<36x64xf32, #tpu.memory_space<vmem>>, vector<16x64xf32>
    %c0_12 = arith.constant 0 : index
    %c0_13 = arith.constant 0 : index
    %c0_14 = arith.constant 0 : index
    %8 = vector.load %arg1[%c0_12, %c0_13, %c0_14] : memref<3x64x128xf32, #tpu.memory_space<vmem>>, vector<1x64x128xf32>
    %9 = vector.shape_cast %8 : vector<1x64x128xf32> to vector<64x128xf32>
    %cst_15 = arith.constant dense<0.000000e+00> : vector<16x128xf32>
    %10 = tpu.matmul %7, %9, %cst_15 {dimension_numbers = #tpu.dot_dimension_numbers<[1], [0], [0], [1], [0, 0, 1, 1], [], []>} : vector<16x64xf32>, vector<64x128xf32>, vector<16x128xf32> -> vector<16x128xf32>
    %c1 = arith.constant 1 : index
    %c0_16 = arith.constant 0 : index
    %11 = vector.load %arg0[%c1, %c0_16] : memref<36x64xf32, #tpu.memory_space<vmem>>, vector<16x64xf32>
    %c1_17 = arith.constant 1 : index
    %c0_18 = arith.constant 0 : index
    %c0_19 = arith.constant 0 : index
    %12 = vector.load %arg1[%c1_17, %c0_18, %c0_19] : memref<3x64x128xf32, #tpu.memory_space<vmem>>, vector<1x64x128xf32>
    %13 = vector.shape_cast %12 : vector<1x64x128xf32> to vector<64x128xf32>
    %cst_20 = arith.constant dense<0.000000e+00> : vector<16x128xf32>
    %14 = tpu.matmul %11, %13, %cst_20 {dimension_numbers = #tpu.dot_dimension_numbers<[1], [0], [0], [1], [0, 0, 1, 1], [], []>} : vector<16x64xf32>, vector<64x128xf32>, vector<16x128xf32> -> vector<16x128xf32>
    %15 = arith.addf %10, %14 : vector<16x128xf32>
    %c2 = arith.constant 2 : index
    %c0_21 = arith.constant 0 : index
    %16 = vector.load %arg0[%c2, %c0_21] : memref<36x64xf32, #tpu.memory_space<vmem>>, vector<16x64xf32>
    %c2_22 = arith.constant 2 : index
    %c0_23 = arith.constant 0 : index
    %c0_24 = arith.constant 0 : index
    %17 = vector.load %arg1[%c2_22, %c0_23, %c0_24] : memref<3x64x128xf32, #tpu.memory_space<vmem>>, vector<1x64x128xf32>
    %18 = vector.shape_cast %17 : vector<1x64x128xf32> to vector<64x128xf32>
    %cst_25 = arith.constant dense<0.000000e+00> : vector<16x128xf32>
    %19 = tpu.matmul %16, %18, %cst_25 {dimension_numbers = #tpu.dot_dimension_numbers<[1], [0], [0], [1], [0, 0, 1, 1], [], []>} : vector<16x64xf32>, vector<64x128xf32>, vector<16x128xf32> -> vector<16x128xf32>
    %20 = arith.addf %15, %19 : vector<16x128xf32>
    %21 = vector.broadcast %4 : vector<1x128xf32> to vector<16x128xf32>
    %22 = arith.addf %20, %21 : vector<16x128xf32>
    %cst_26 = arith.constant 0.000000e+00 : f32
    %23 = vector.broadcast %cst_26 : f32 to vector<16x128xf32>
    %24 = arith.maximumf %22, %23 : vector<16x128xf32>
    %c1_27 = arith.constant 1 : index
    %c0_28 = arith.constant 0 : index
    %25 = vector.load %arg12[%c1_27, %c0_28] : memref<36x128xf32, #tpu.memory_space<vmem>>, vector<16x128xf32>
    tpu.vector_store %arg12[%c1_27, %c0_28], %24 {strides = array<i32>} : memref<36x128xf32, #tpu.memory_space<vmem>>, vector<16x128xf32>,
    %c18 = arith.constant 18 : index
    %c0_29 = arith.constant 0 : index
    %26 = vector.load %arg0[%c18, %c0_29] : memref<36x64xf32, #tpu.memory_space<vmem>>, vector<16x64xf32>
    %c0_30 = arith.constant 0 : index
    %c0_31 = arith.constant 0 : index
    %c0_32 = arith.constant 0 : index
    %27 = vector.load %arg1[%c0_30, %c0_31, %c0_32] : memref<3x64x128xf32, #tpu.memory_space<vmem>>, vector<1x64x128xf32>
    %28 = vector.shape_cast %27 : vector<1x64x128xf32> to vector<64x128xf32>
    %cst_33 = arith.constant dense<0.000000e+00> : vector<16x128xf32>
    %29 = tpu.matmul %26, %28, %cst_33 {dimension_numbers = #tpu.dot_dimension_numbers<[1], [0], [0], [1], [0, 0, 1, 1], [], []>} : vector<16x64xf32>, vector<64x128xf32>, vector<16x128xf32> -> vector<16x128xf32>
    %c19 = arith.constant 19 : index
    %c0_34 = arith.constant 0 : index
    %30 = vector.load %arg0[%c19, %c0_34] : memref<36x64xf32, #tpu.memory_space<vmem>>, vector<16x64xf32>
    %c1_35 = arith.constant 1 : index
    %c0_36 = arith.constant 0 : index
    %c0_37 = arith.constant 0 : index
    %31 = vector.load %arg1[%c1_35, %c0_36, %c0_37] : memref<3x64x128xf32, #tpu.memory_space<vmem>>, vector<1x64x128xf32>
    %32 = vector.shape_cast %31 : vector<1x64x128xf32> to vector<64x128xf32>
    %cst_38 = arith.constant dense<0.000000e+00> : vector<16x128xf32>
    %33 = tpu.matmul %30, %32, %cst_38 {dimension_numbers = #tpu.dot_dimension_numbers<[1], [0], [0], [1], [0, 0, 1, 1], [], []>} : vector<16x64xf32>, vector<64x128xf32>, vector<16x128xf32> -> vector<16x128xf32>
    %34 = arith.addf %29, %33 : vector<16x128xf32>
    %c20 = arith.constant 20 : index
    %c0_39 = arith.constant 0 : index
    %35 = vector.load %arg0[%c20, %c0_39] : memref<36x64xf32, #tpu.memory_space<vmem>>, vector<16x64xf32>
    %c2_40 = arith.constant 2 : index
    %c0_41 = arith.constant 0 : index
    %c0_42 = arith.constant 0 : index
    %36 = vector.load %arg1[%c2_40, %c0_41, %c0_42] : memref<3x64x128xf32, #tpu.memory_space<vmem>>, vector<1x64x128xf32>
    %37 = vector.shape_cast %36 : vector<1x64x128xf32> to vector<64x128xf32>
    %cst_43 = arith.constant dense<0.000000e+00> : vector<16x128xf32>
    %38 = tpu.matmul %35, %37, %cst_43 {dimension_numbers = #tpu.dot_dimension_numbers<[1], [0], [0], [1], [0, 0, 1, 1], [], []>} : vector<16x64xf32>, vector<64x128xf32>, vector<16x128xf32> -> vector<16x128xf32>
    %39 = arith.addf %34, %38 : vector<16x128xf32>
    %40 = vector.broadcast %4 : vector<1x128xf32> to vector<16x128xf32>
    %41 = arith.addf %39, %40 : vector<16x128xf32>
    %cst_44 = arith.constant 0.000000e+00 : f32
    %42 = vector.broadcast %cst_44 : f32 to vector<16x128xf32>
    %43 = arith.maximumf %41, %42 : vector<16x128xf32>
    %c19_45 = arith.constant 19 : index
    %c0_46 = arith.constant 0 : index
    %44 = vector.load %arg12[%c19_45, %c0_46] : memref<36x128xf32, #tpu.memory_space<vmem>>, vector<16x128xf32>
    tpu.vector_store %arg12[%c19_45, %c0_46], %43 {strides = array<i32>} : memref<36x128xf32, #tpu.memory_space<vmem>>, vector<16x128xf32>,
    %c0_47 = arith.constant 0 : index
    %c0_48 = arith.constant 0 : index
    %45 = tpu.strided_load %arg12[%c0_47, %c0_48] {strides = array<i32: 2, 1>} : memref<36x128xf32, #tpu.memory_space<vmem>>, vector<8x128xf32>
    %c0_49 = arith.constant 0 : index
    %c0_50 = arith.constant 0 : index
    %c0_51 = arith.constant 0 : index
    %46 = vector.load %arg3[%c0_49, %c0_50, %c0_51] : memref<3x128x128xf32, #tpu.memory_space<vmem>>, vector<1x128x128xf32>
    %47 = vector.shape_cast %46 : vector<1x128x128xf32> to vector<128x128xf32>
    %cst_52 = arith.constant dense<0.000000e+00> : vector<8x128xf32>
    %48 = tpu.matmul %45, %47, %cst_52 {dimension_numbers = #tpu.dot_dimension_numbers<[1], [0], [0], [1], [0, 0, 1, 1], [], []>} : vector<8x128xf32>, vector<128x128xf32>, vector<8x128xf32> -> vector<8x128xf32>
    %c1_53 = arith.constant 1 : index
    %c0_54 = arith.constant 0 : index
    %49 = tpu.strided_load %arg12[%c1_53, %c0_54] {strides = array<i32: 2, 1>} : memref<36x128xf32, #tpu.memory_space<vmem>>, vector<8x128xf32>
    %c1_55 = arith.constant 1 : index
    %c0_56 = arith.constant 0 : index
    %c0_57 = arith.constant 0 : index
    %50 = vector.load %arg3[%c1_55, %c0_56, %c0_57] : memref<3x128x128xf32, #tpu.memory_space<vmem>>, vector<1x128x128xf32>
    %51 = vector.shape_cast %50 : vector<1x128x128xf32> to vector<128x128xf32>
    %cst_58 = arith.constant dense<0.000000e+00> : vector<8x128xf32>
    %52 = tpu.matmul %49, %51, %cst_58 {dimension_numbers = #tpu.dot_dimension_numbers<[1], [0], [0], [1], [0, 0, 1, 1], [], []>} : vector<8x128xf32>, vector<128x128xf32>, vector<8x128xf32> -> vector<8x128xf32>
    %53 = arith.addf %48, %52 : vector<8x128xf32>
    %c2_59 = arith.constant 2 : index
    %c0_60 = arith.constant 0 : index
    %54 = tpu.strided_load %arg12[%c2_59, %c0_60] {strides = array<i32: 2, 1>} : memref<36x128xf32, #tpu.memory_space<vmem>>, vector<8x128xf32>
    %c2_61 = arith.constant 2 : index
    %c0_62 = arith.constant 0 : index
    %c0_63 = arith.constant 0 : index
    %55 = vector.load %arg3[%c2_61, %c0_62, %c0_63] : memref<3x128x128xf32, #tpu.memory_space<vmem>>, vector<1x128x128xf32>
    %56 = vector.shape_cast %55 : vector<1x128x128xf32> to vector<128x128xf32>
    %cst_64 = arith.constant dense<0.000000e+00> : vector<8x128xf32>
    %57 = tpu.matmul %54, %56, %cst_64 {dimension_numbers = #tpu.dot_dimension_numbers<[1], [0], [0], [1], [0, 0, 1, 1], [], []>} : vector<8x128xf32>, vector<128x128xf32>, vector<8x128xf32> -> vector<8x128xf32>
    %58 = arith.addf %53, %57 : vector<8x128xf32>
    %59 = vector.broadcast %5 : vector<1x128xf32> to vector<8x128xf32>
    %60 = arith.addf %58, %59 : vector<8x128xf32>
    %cst_65 = arith.constant 0.000000e+00 : f32
    %61 = vector.broadcast %cst_65 : f32 to vector<8x128xf32>
    %62 = arith.maximumf %60, %61 : vector<8x128xf32>
    %c1_66 = arith.constant 1 : index
    %c0_67 = arith.constant 0 : index
    %63 = vector.load %arg13[%c1_66, %c0_67] : memref<20x128xf32, #tpu.memory_space<vmem>>, vector<8x128xf32>
    tpu.vector_store %arg13[%c1_66, %c0_67], %62 {strides = array<i32>} : memref<20x128xf32, #tpu.memory_space<vmem>>, vector<8x128xf32>,
    %c18_68 = arith.constant 18 : index
    %c0_69 = arith.constant 0 : index
    %64 = tpu.strided_load %arg12[%c18_68, %c0_69] {strides = array<i32: 2, 1>} : memref<36x128xf32, #tpu.memory_space<vmem>>, vector<8x128xf32>
    %c0_70 = arith.constant 0 : index
    %c0_71 = arith.constant 0 : index
    %c0_72 = arith.constant 0 : index
    %65 = vector.load %arg3[%c0_70, %c0_71, %c0_72] : memref<3x128x128xf32, #tpu.memory_space<vmem>>, vector<1x128x128xf32>
    %66 = vector.shape_cast %65 : vector<1x128x128xf32> to vector<128x128xf32>
    %cst_73 = arith.constant dense<0.000000e+00> : vector<8x128xf32>
    %67 = tpu.matmul %64, %66, %cst_73 {dimension_numbers = #tpu.dot_dimension_numbers<[1], [0], [0], [1], [0, 0, 1, 1], [], []>} : vector<8x128xf32>, vector<128x128xf32>, vector<8x128xf32> -> vector<8x128xf32>
    %c19_74 = arith.constant 19 : index
    %c0_75 = arith.constant 0 : index
    %68 = tpu.strided_load %arg12[%c19_74, %c0_75] {strides = array<i32: 2, 1>} : memref<36x128xf32, #tpu.memory_space<vmem>>, vector<8x128xf32>
    %c1_76 = arith.constant 1 : index
    %c0_77 = arith.constant 0 : index
    %c0_78 = arith.constant 0 : index
    %69 = vector.load %arg3[%c1_76, %c0_77, %c0_78] : memref<3x128x128xf32, #tpu.memory_space<vmem>>, vector<1x128x128xf32>
    %70 = vector.shape_cast %69 : vector<1x128x128xf32> to vector<128x128xf32>
    %cst_79 = arith.constant dense<0.000000e+00> : vector<8x128xf32>
    %71 = tpu.matmul %68, %70, %cst_79 {dimension_numbers = #tpu.dot_dimension_numbers<[1], [0], [0], [1], [0, 0, 1, 1], [], []>} : vector<8x128xf32>, vector<128x128xf32>, vector<8x128xf32> -> vector<8x128xf32>
    %72 = arith.addf %67, %71 : vector<8x128xf32>
    %c20_80 = arith.constant 20 : index
    %c0_81 = arith.constant 0 : index
    %73 = tpu.strided_load %arg12[%c20_80, %c0_81] {strides = array<i32: 2, 1>} : memref<36x128xf32, #tpu.memory_space<vmem>>, vector<8x128xf32>
    %c2_82 = arith.constant 2 : index
    %c0_83 = arith.constant 0 : index
    %c0_84 = arith.constant 0 : index
    %74 = vector.load %arg3[%c2_82, %c0_83, %c0_84] : memref<3x128x128xf32, #tpu.memory_space<vmem>>, vector<1x128x128xf32>
    %75 = vector.shape_cast %74 : vector<1x128x128xf32> to vector<128x128xf32>
    %cst_85 = arith.constant dense<0.000000e+00> : vector<8x128xf32>
    %76 = tpu.matmul %73, %75, %cst_85 {dimension_numbers = #tpu.dot_dimension_numbers<[1], [0], [0], [1], [0, 0, 1, 1], [], []>} : vector<8x128xf32>, vector<128x128xf32>, vector<8x128xf32> -> vector<8x128xf32>
    %77 = arith.addf %72, %76 : vector<8x128xf32>
    %78 = vector.broadcast %5 : vector<1x128xf32> to vector<8x128xf32>
    %79 = arith.addf %77, %78 : vector<8x128xf32>
    %cst_86 = arith.constant 0.000000e+00 : f32
    %80 = vector.broadcast %cst_86 : f32 to vector<8x128xf32>
    %81 = arith.maximumf %79, %80 : vector<8x128xf32>
    %c11 = arith.constant 11 : index
    %c0_87 = arith.constant 0 : index
    %82 = vector.load %arg13[%c11, %c0_87] : memref<20x128xf32, #tpu.memory_space<vmem>>, vector<8x128xf32>
    tpu.vector_store %arg13[%c11, %c0_87], %81 {strides = array<i32>} : memref<20x128xf32, #tpu.memory_space<vmem>>, vector<8x128xf32>,
    %c0_88 = arith.constant 0 : index
    %c0_89 = arith.constant 0 : index
    %83 = tpu.strided_load %arg13[%c0_88, %c0_89] {strides = array<i32: 2, 1>} : memref<20x128xf32, #tpu.memory_space<vmem>>, vector<4x128xf32>
    %c0_90 = arith.constant 0 : index
    %c0_91 = arith.constant 0 : index
    %c0_92 = arith.constant 0 : index
    %84 = vector.load %arg5[%c0_90, %c0_91, %c0_92] : memref<3x128x64xf32, #tpu.memory_space<vmem>>, vector<1x128x64xf32>
    %85 = vector.shape_cast %84 : vector<1x128x64xf32> to vector<128x64xf32>
    %cst_93 = arith.constant dense<0.000000e+00> : vector<4x64xf32>
    %86 = tpu.matmul %83, %85, %cst_93 {dimension_numbers = #tpu.dot_dimension_numbers<[1], [0], [0], [1], [0, 0, 1, 1], [], []>} : vector<4x128xf32>, vector<128x64xf32>, vector<4x64xf32> -> vector<4x64xf32>
    %c1_94 = arith.constant 1 : index
    %c0_95 = arith.constant 0 : index
    %87 = tpu.strided_load %arg13[%c1_94, %c0_95] {strides = array<i32: 2, 1>} : memref<20x128xf32, #tpu.memory_space<vmem>>, vector<4x128xf32>
    %c1_96 = arith.constant 1 : index
    %c0_97 = arith.constant 0 : index
    %c0_98 = arith.constant 0 : index
    %88 = vector.load %arg5[%c1_96, %c0_97, %c0_98] : memref<3x128x64xf32, #tpu.memory_space<vmem>>, vector<1x128x64xf32>
    %89 = vector.shape_cast %88 : vector<1x128x64xf32> to vector<128x64xf32>
    %cst_99 = arith.constant dense<0.000000e+00> : vector<4x64xf32>
    %90 = tpu.matmul %87, %89, %cst_99 {dimension_numbers = #tpu.dot_dimension_numbers<[1], [0], [0], [1], [0, 0, 1, 1], [], []>} : vector<4x128xf32>, vector<128x64xf32>, vector<4x64xf32> -> vector<4x64xf32>
    %91 = arith.addf %86, %90 : vector<4x64xf32>
    %c2_100 = arith.constant 2 : index
    %c0_101 = arith.constant 0 : index
    %92 = tpu.strided_load %arg13[%c2_100, %c0_101] {strides = array<i32: 2, 1>} : memref<20x128xf32, #tpu.memory_space<vmem>>, vector<4x128xf32>
    %c2_102 = arith.constant 2 : index
    %c0_103 = arith.constant 0 : index
    %c0_104 = arith.constant 0 : index
    %93 = vector.load %arg5[%c2_102, %c0_103, %c0_104] : memref<3x128x64xf32, #tpu.memory_space<vmem>>, vector<1x128x64xf32>
    %94 = vector.shape_cast %93 : vector<1x128x64xf32> to vector<128x64xf32>
    %cst_105 = arith.constant dense<0.000000e+00> : vector<4x64xf32>
    %95 = tpu.matmul %92, %94, %cst_105 {dimension_numbers = #tpu.dot_dimension_numbers<[1], [0], [0], [1], [0, 0, 1, 1], [], []>} : vector<4x128xf32>, vector<128x64xf32>, vector<4x64xf32> -> vector<4x64xf32>
    %96 = arith.addf %91, %95 : vector<4x64xf32>
    %97 = vector.broadcast %6 : vector<1x64xf32> to vector<4x64xf32>
    %98 = arith.addf %96, %97 : vector<4x64xf32>
    %cst_106 = arith.constant 0.000000e+00 : f32
    %99 = vector.broadcast %cst_106 : f32 to vector<4x64xf32>
    %100 = arith.maximumf %98, %99 : vector<4x64xf32>
    %c10 = arith.constant 10 : index
    %c0_107 = arith.constant 0 : index
    %101 = tpu.strided_load %arg13[%c10, %c0_107] {strides = array<i32: 2, 1>} : memref<20x128xf32, #tpu.memory_space<vmem>>, vector<4x128xf32>
    %c0_108 = arith.constant 0 : index
    %c0_109 = arith.constant 0 : index
    %c0_110 = arith.constant 0 : index
    %102 = vector.load %arg5[%c0_108, %c0_109, %c0_110] : memref<3x128x64xf32, #tpu.memory_space<vmem>>, vector<1x128x64xf32>
    %103 = vector.shape_cast %102 : vector<1x128x64xf32> to vector<128x64xf32>
    %cst_111 = arith.constant dense<0.000000e+00> : vector<4x64xf32>
    %104 = tpu.matmul %101, %103, %cst_111 {dimension_numbers = #tpu.dot_dimension_numbers<[1], [0], [0], [1], [0, 0, 1, 1], [], []>} : vector<4x128xf32>, vector<128x64xf32>, vector<4x64xf32> -> vector<4x64xf32>
    %c11_112 = arith.constant 11 : index
    %c0_113 = arith.constant 0 : index
    %105 = tpu.strided_load %arg13[%c11_112, %c0_113] {strides = array<i32: 2, 1>} : memref<20x128xf32, #tpu.memory_space<vmem>>, vector<4x128xf32>
    %c1_114 = arith.constant 1 : index
    %c0_115 = arith.constant 0 : index
    %c0_116 = arith.constant 0 : index
    %106 = vector.load %arg5[%c1_114, %c0_115, %c0_116] : memref<3x128x64xf32, #tpu.memory_space<vmem>>, vector<1x128x64xf32>
    %107 = vector.shape_cast %106 : vector<1x128x64xf32> to vector<128x64xf32>
    %cst_117 = arith.constant dense<0.000000e+00> : vector<4x64xf32>
    %108 = tpu.matmul %105, %107, %cst_117 {dimension_numbers = #tpu.dot_dimension_numbers<[1], [0], [0], [1], [0, 0, 1, 1], [], []>} : vector<4x128xf32>, vector<128x64xf32>, vector<4x64xf32> -> vector<4x64xf32>
    %109 = arith.addf %104, %108 : vector<4x64xf32>
    %c12 = arith.constant 12 : index
    %c0_118 = arith.constant 0 : index
    %110 = tpu.strided_load %arg13[%c12, %c0_118] {strides = array<i32: 2, 1>} : memref<20x128xf32, #tpu.memory_space<vmem>>, vector<4x128xf32>
    %c2_119 = arith.constant 2 : index
    %c0_120 = arith.constant 0 : index
    %c0_121 = arith.constant 0 : index
    %111 = vector.load %arg5[%c2_119, %c0_120, %c0_121] : memref<3x128x64xf32, #tpu.memory_space<vmem>>, vector<1x128x64xf32>
    %112 = vector.shape_cast %111 : vector<1x128x64xf32> to vector<128x64xf32>
    %cst_122 = arith.constant dense<0.000000e+00> : vector<4x64xf32>
    %113 = tpu.matmul %110, %112, %cst_122 {dimension_numbers = #tpu.dot_dimension_numbers<[1], [0], [0], [1], [0, 0, 1, 1], [], []>} : vector<4x128xf32>, vector<128x64xf32>, vector<4x64xf32> -> vector<4x64xf32>
    %114 = arith.addf %109, %113 : vector<4x64xf32>
    %115 = vector.broadcast %6 : vector<1x64xf32> to vector<4x64xf32>
    %116 = arith.addf %114, %115 : vector<4x64xf32>
    %cst_123 = arith.constant 0.000000e+00 : f32
    %117 = vector.broadcast %cst_123 : f32 to vector<4x64xf32>
    %118 = arith.maximumf %116, %117 : vector<4x64xf32>
    %c0_124 = arith.constant 0 : index
    %c0_125 = arith.constant 0 : index
    %119 = vector.load %arg8[%c0_124, %c0_125] : memref<1x32xf32, #tpu.memory_space<vmem>>, vector<1x32xf32>
    %120 = vector.extract_strided_slice %100 {offsets = [0, 0], sizes = [1, 64], strides = [1, 1]} : vector<4x64xf32> to vector<1x64xf32>
    %121 = vector.extract_strided_slice %118 {offsets = [0, 0], sizes = [1, 64], strides = [1, 1]} : vector<4x64xf32> to vector<1x64xf32>
    %122 = tpu.concatenate %120, %121 in 0 : vector<1x64xf32>, vector<1x64xf32> -> vector<2x64xf32>
    %c0_126 = arith.constant 0 : index
    %c0_127 = arith.constant 0 : index
    %c0_128 = arith.constant 0 : index
    %123 = vector.load %arg7[%c0_126, %c0_127, %c0_128] : memref<4x64x32xf32, #tpu.memory_space<vmem>>, vector<1x64x32xf32>
    %124 = vector.shape_cast %123 : vector<1x64x32xf32> to vector<64x32xf32>
    %cst_129 = arith.constant dense<0.000000e+00> : vector<2x32xf32>
    %125 = tpu.matmul %122, %124, %cst_129 {dimension_numbers = #tpu.dot_dimension_numbers<[1], [0], [0], [1], [0, 0, 1, 1], [], []>, precision = #tpu.contract_precision<fp32>} : vector<2x64xf32>, vector<64x32xf32>, vector<2x32xf32> -> vector<2x32xf32>
    %126 = vector.broadcast %119 : vector<1x32xf32> to vector<2x32xf32>
    %127 = arith.addf %126, %125 : vector<2x32xf32>
    %128 = vector.extract_strided_slice %100 {offsets = [1, 0], sizes = [1, 64], strides = [1, 1]} : vector<4x64xf32> to vector<1x64xf32>
    %129 = vector.extract_strided_slice %118 {offsets = [1, 0], sizes = [1, 64], strides = [1, 1]} : vector<4x64xf32> to vector<1x64xf32>
    %130 = tpu.concatenate %128, %129 in 0 : vector<1x64xf32>, vector<1x64xf32> -> vector<2x64xf32>
    %c1_130 = arith.constant 1 : index
    %c0_131 = arith.constant 0 : index
    %c0_132 = arith.constant 0 : index
    %131 = vector.load %arg7[%c1_130, %c0_131, %c0_132] : memref<4x64x32xf32, #tpu.memory_space<vmem>>, vector<1x64x32xf32>
    %132 = vector.shape_cast %131 : vector<1x64x32xf32> to vector<64x32xf32>
    %cst_133 = arith.constant dense<0.000000e+00> : vector<2x32xf32>
    %133 = tpu.matmul %130, %132, %cst_133 {dimension_numbers = #tpu.dot_dimension_numbers<[1], [0], [0], [1], [0, 0, 1, 1], [], []>, precision = #tpu.contract_precision<fp32>} : vector<2x64xf32>, vector<64x32xf32>, vector<2x32xf32> -> vector<2x32xf32>
    %134 = arith.addf %127, %133 : vector<2x32xf32>
    %135 = vector.extract_strided_slice %100 {offsets = [2, 0], sizes = [1, 64], strides = [1, 1]} : vector<4x64xf32> to vector<1x64xf32>
    %136 = vector.extract_strided_slice %118 {offsets = [2, 0], sizes = [1, 64], strides = [1, 1]} : vector<4x64xf32> to vector<1x64xf32>
    %137 = tpu.concatenate %135, %136 in 0 : vector<1x64xf32>, vector<1x64xf32> -> vector<2x64xf32>
    %c2_134 = arith.constant 2 : index
    %c0_135 = arith.constant 0 : index
    %c0_136 = arith.constant 0 : index
    %138 = vector.load %arg7[%c2_134, %c0_135, %c0_136] : memref<4x64x32xf32, #tpu.memory_space<vmem>>, vector<1x64x32xf32>
    %139 = vector.shape_cast %138 : vector<1x64x32xf32> to vector<64x32xf32>
    %cst_137 = arith.constant dense<0.000000e+00> : vector<2x32xf32>
    %140 = tpu.matmul %137, %139, %cst_137 {dimension_numbers = #tpu.dot_dimension_numbers<[1], [0], [0], [1], [0, 0, 1, 1], [], []>, precision = #tpu.contract_precision<fp32>} : vector<2x64xf32>, vector<64x32xf32>, vector<2x32xf32> -> vector<2x32xf32>
    %141 = arith.addf %134, %140 : vector<2x32xf32>
    %142 = vector.extract_strided_slice %100 {offsets = [3, 0], sizes = [1, 64], strides = [1, 1]} : vector<4x64xf32> to vector<1x64xf32>
    %143 = vector.extract_strided_slice %118 {offsets = [3, 0], sizes = [1, 64], strides = [1, 1]} : vector<4x64xf32> to vector<1x64xf32>
    %144 = tpu.concatenate %142, %143 in 0 : vector<1x64xf32>, vector<1x64xf32> -> vector<2x64xf32>
    %c3 = arith.constant 3 : index
    %c0_138 = arith.constant 0 : index
    %c0_139 = arith.constant 0 : index
    %145 = vector.load %arg7[%c3, %c0_138, %c0_139] : memref<4x64x32xf32, #tpu.memory_space<vmem>>, vector<1x64x32xf32>
    %146 = vector.shape_cast %145 : vector<1x64x32xf32> to vector<64x32xf32>
    %cst_140 = arith.constant dense<0.000000e+00> : vector<2x32xf32>
    %147 = tpu.matmul %144, %146, %cst_140 {dimension_numbers = #tpu.dot_dimension_numbers<[1], [0], [0], [1], [0, 0, 1, 1], [], []>, precision = #tpu.contract_precision<fp32>} : vector<2x64xf32>, vector<64x32xf32>, vector<2x32xf32> -> vector<2x32xf32>
    %148 = arith.addf %141, %147 : vector<2x32xf32>
    %cst_141 = arith.constant 0.000000e+00 : f32
    %149 = vector.broadcast %cst_141 : f32 to vector<2x32xf32>
    %150 = arith.maximumf %148, %149 : vector<2x32xf32>
    %c0_142 = arith.constant 0 : index
    %c0_143 = arith.constant 0 : index
    %151 = vector.load %arg9[%c0_142, %c0_143] : memref<32x10xf32, #tpu.memory_space<vmem>>, vector<32x10xf32>
    %cst_144 = arith.constant dense<0.000000e+00> : vector<2x10xf32>
    %152 = tpu.matmul %150, %151, %cst_144 {dimension_numbers = #tpu.dot_dimension_numbers<[1], [0], [0], [1], [0, 0, 1, 1], [], []>, precision = #tpu.contract_precision<fp32>} : vector<2x32xf32>, vector<32x10xf32>, vector<2x10xf32> -> vector<2x10xf32>
    %c0_145 = arith.constant 0 : index
    %c0_146 = arith.constant 0 : index
    %153 = vector.load %arg10[%c0_145, %c0_146] : memref<1x10xf32, #tpu.memory_space<vmem>>, vector<1x10xf32>
    %154 = vector.broadcast %153 : vector<1x10xf32> to vector<2x10xf32>
    %155 = arith.addf %152, %154 : vector<2x10xf32>
    %c0_147 = arith.constant 0 : index
    %c0_148 = arith.constant 0 : index
    %156 = vector.load %arg11[%c0_147, %c0_148] : memref<2x10xf32, #tpu.memory_space<vmem>>, vector<2x10xf32>
    tpu.vector_store %arg11[%c0_147, %c0_148], %155 {strides = array<i32>} : memref<2x10xf32, #tpu.memory_space<vmem>>, vector<2x10xf32>,
    return
  }
}

</mosaic_0001>

<llo_original>
// kernel: _fused_forward_impl.1
$region0: #{_fused_forward_impl.1}
  #allocation0 [shape = 'u32[]', space=smem, size = 0x4, offset = 0x4, fixed_abs, tag = 'smem constant byte address 0x4 - core index']
  #allocation1 [shape = 'u32[72,128]{1,0:T(1,128)}', space=vmem, size = 0x9000, scoped, tag = 'internal scratch']
  #allocation2 [shape = 'f32[36,128]{1,0:T(8,128)}', space=vmem, size = 0x5000, scoped, tag = 'scratch operand']
  #allocation3 [shape = 'f32[20,128]{1,0:T(8,128)}', space=vmem, size = 0x3000, scoped, tag = 'scratch operand']
  %s0 = inlined_call_operand.vmem [shape: f32[36,64], index: 0, kind: input, shape index: {}]
  %s1 = inlined_call_operand.vmem [shape: f32[3,64,128], index: 1, kind: input, shape index: {}]
  %s2 = inlined_call_operand.vmem [shape: f32[1,128], index: 2, kind: input, shape index: {}]
  %s3 = inlined_call_operand.vmem [shape: f32[3,128,128], index: 3, kind: input, shape index: {}]
  %s4 = inlined_call_operand.vmem [shape: f32[1,128], index: 4, kind: input, shape index: {}]
  %s5 = inlined_call_operand.vmem [shape: f32[3,128,64], index: 5, kind: input, shape index: {}]
  %s6 = inlined_call_operand.vmem [shape: f32[1,64], index: 6, kind: input, shape index: {}]
  %s7 = inlined_call_operand.vmem [shape: f32[4,64,32], index: 7, kind: input, shape index: {}]
  %s8 = inlined_call_operand.vmem [shape: f32[1,32], index: 8, kind: input, shape index: {}]
  %s9 = inlined_call_operand.vmem [shape: f32[32,10], index: 9, kind: input, shape index: {}]
  %s10 = inlined_call_operand.vmem [shape: f32[1,10], index: 10, kind: input, shape index: {}]
  %s11 = inlined_call_operand.hbm [shape: f32[2,10], index: 11, kind: output, shape index: {}]
  %s12 = sld [smem:[#allocation0]]
  $region54: #{_fused_forward_impl.1} parent=0
    _
  %s14 = ssub.s32 1, %s12
  %s15 = scalar_select 0, %s14, %s12
  $region1: #{_fused_forward_impl.1} parent=0
    #allocation4 [shape = 'u8[1024]{0}', space=vmem, size = 0x400, scoped, tag = 'output window, operand 0, single buffered']
    #allocation5 [shape = 's32[1]{0}', space=sflag, size = 0x4, scoped, tag = 'scoped memory for _fused_forward_impl.1']
    %16 = vsyncpa [#allocation5], 0
    // Predicated region
    $region2: #{_fused_forward_impl.1} parent=1 // pred_check
      _
    $region3: #{_fused_forward_impl.1} parent=1 // pred_check_branch
      %18 = sbr.rel (0) target = $region5
    $region4: #{_fused_forward_impl.1} parent=1 // pred_region
      _
    $region5: #{_fused_forward_impl.1} parent=1 // pred_fallthru
      _
    // Predicated region
    $region6: #{_fused_forward_impl.1} parent=1 // pred_check
      _
    $region7: #{_fused_forward_impl.1} parent=1 // pred_check_branch
      %20 = sbr.rel (0) target = $region9
    $region8: #{_fused_forward_impl.1} parent=1 // pred_region
      _
    $region9: #{_fused_forward_impl.1} parent=1 // pred_fallthru
      _
    // Predicated region
    $region10: #{_fused_forward_impl.1} parent=1 // pred_check
      _
    $region11: #{_fused_forward_impl.1} parent=1 // pred_check_branch
      %22 = sbr.rel (0) target = $region13
    $region12: #{_fused_forward_impl.1} parent=1 // pred_region
      _
    $region13: #{_fused_forward_impl.1} parent=1 // pred_fallthru
      _
    // Predicated region
    $region14: #{_fused_forward_impl.1} parent=1 // pred_check
      _
    $region15: #{_fused_forward_impl.1} parent=1 // pred_check_branch
      %24 = sbr.rel (0) target = $region17
    $region16: #{_fused_forward_impl.1} parent=1 // pred_region
      _
    $region17: #{_fused_forward_impl.1} parent=1 // pred_fallthru
      _
    // Predicated region
    $region18: #{_fused_forward_impl.1} parent=1 // pred_check
      _
    $region19: #{_fused_forward_impl.1} parent=1 // pred_check_branch
      %26 = sbr.rel (0) target = $region21
    $region20: #{_fused_forward_impl.1} parent=1 // pred_region
      _
    $region21: #{_fused_forward_impl.1} parent=1 // pred_fallthru
      _
    // Predicated region
    $region22: #{_fused_forward_impl.1} parent=1 // pred_check
      _
    $region23: #{_fused_forward_impl.1} parent=1 // pred_check_branch
      %28 = sbr.rel (0) target = $region25
    $region24: #{_fused_forward_impl.1} parent=1 // pred_region
      _
    $region25: #{_fused_forward_impl.1} parent=1 // pred_fallthru
      _
    // Predicated region
    $region26: #{_fused_forward_impl.1} parent=1 // pred_check
      _
    $region27: #{_fused_forward_impl.1} parent=1 // pred_check_branch
      %30 = sbr.rel (0) target = $region29
    $region28: #{_fused_forward_impl.1} parent=1 // pred_region
      _
    $region29: #{_fused_forward_impl.1} parent=1 // pred_fallthru
      _
    // Predicated region
    $region30: #{_fused_forward_impl.1} parent=1 // pred_check
      _
    $region31: #{_fused_forward_impl.1} parent=1 // pred_check_branch
      %32 = sbr.rel (0) target = $region33
    $region32: #{_fused_forward_impl.1} parent=1 // pred_region
      _
    $region33: #{_fused_forward_impl.1} parent=1 // pred_fallthru
      _
    // Predicated region
    $region34: #{_fused_forward_impl.1} parent=1 // pred_check
      _
    $region35: #{_fused_forward_impl.1} parent=1 // pred_check_branch
      %34 = sbr.rel (0) target = $region37
    $region36: #{_fused_forward_impl.1} parent=1 // pred_region
      _
    $region37: #{_fused_forward_impl.1} parent=1 // pred_fallthru
      _
    // Predicated region
    $region38: #{_fused_forward_impl.1} parent=1 // pred_check
      _
    $region39: #{_fused_forward_impl.1} parent=1 // pred_check_branch
      %36 = sbr.rel (0) target = $region41
    $region40: #{_fused_forward_impl.1} parent=1 // pred_region
      _
    $region41: #{_fused_forward_impl.1} parent=1 // pred_fallthru
      _
    // Predicated region
    $region42: #{_fused_forward_impl.1} parent=1 // pred_check
      _
    $region43: #{_fused_forward_impl.1} parent=1 // pred_check_branch
      %38 = sbr.rel (0) target = $region45
    $region44: #{_fused_forward_impl.1} parent=1 // pred_region
      _
    $region45: #{_fused_forward_impl.1} parent=1 // pred_fallthru
      _
    %39 = vst [vmem:[#allocation2] sm:$0xff] 0.0
    %40 = vst [vmem:[#allocation2 + $0x8] sm:$0xff] 0.0
    %41 = vst [vmem:[#allocation2 + $0x10] sm:$0xff] 0.0
    %42 = vst [vmem:[#allocation2 + $0x18] sm:$0xff] 0.0
    %43 = vst [vmem:[#allocation2 + $0x20] sm:$0xf] 0.0
    %44 = vst [vmem:[#allocation3] sm:$0xff] 0.0
    %45 = vst [vmem:[#allocation3 + $0x8] sm:$0xff] 0.0
    %46 = vst [vmem:[#allocation3 + $0x10] sm:$0xf] 0.0
    %v47 = vld [vmem:[%s2] sm:$0x1]
    %v48 = vld [vmem:[%s4] sm:$0x1]
    %v49 = vld [vmem:[%s6] sm:$0x1]
    %v50 = vld [vmem:[%s0] sm:$0xff]
    %v51 = vld [vmem:[%s0 + $0x8] sm:$0xff]
    %v52 = vld [vmem:[%s1] sm:$0xff]
    %v53 = vld [vmem:[%s1 + $0x8] sm:$0xff]
    %v54 = vld [vmem:[%s1 + $0x10] sm:$0xff]
    %v55 = vld [vmem:[%s1 + $0x18] sm:$0xff]
    %v56 = vld [vmem:[%s1 + $0x20] sm:$0xff]
    %v57 = vld [vmem:[%s1 + $0x28] sm:$0xff]
    %v58 = vld [vmem:[%s1 + $0x30] sm:$0xff]
    %v59 = vld [vmem:[%s1 + $0x38] sm:$0xff]
    %v60 = vld [vmem:[%s0 + $0x1] sm:$0xff]
    %v61 = vld [vmem:[%s0 + $0x9] sm:$0xff]
    %s62 = scalar_lea.vmem %s1, 64
    %v63 = vld [vmem:[%s62] sm:$0xff]
    %v64 = vld [vmem:[%s62 + $0x8] sm:$0xff]
    %v65 = vld [vmem:[%s62 + $0x10] sm:$0xff]
    %v66 = vld [vmem:[%s62 + $0x18] sm:$0xff]
    %v67 = vld [vmem:[%s62 + $0x20] sm:$0xff]
    %v68 = vld [vmem:[%s62 + $0x28] sm:$0xff]
    %v69 = vld [vmem:[%s62 + $0x30] sm:$0xff]
    %v70 = vld [vmem:[%s62 + $0x38] sm:$0xff]
    %vm71 = vcmask 523264
    %v73 = vsel %vm71, %v60, 0
    %v76 = vsel %vm71, %v61, 0
    %78 = vmatpush.msra.mxu0 0.0
    %79 = vmatpush.msra.mxu0 0.0
    %80 = vmatpush.msra.mxu0 0.0
    %81 = vmatpush.msra.mxu0 0.0
    %82 = vmatpush.msra.mxu0 0.0
    %83 = vmatpush.msra.mxu0 0.0
    %84 = vmatpush.msra.mxu0 0.0
    %85 = vmatpush.msra.mxu0 0.0
    %86 = vmatpush.msra.mxu0 %v70
    %87 = vmatpush.msra.mxu0 %v69
    %88 = vmatpush.msra.mxu0 %v68
    %89 = vmatpush.msra.mxu0 %v67
    %90 = vmatpush.msra.mxu0 %v66
    %91 = vmatpush.msra.mxu0 %v65
    %92 = vmatpush.msra.mxu0 %v64
    %93 = vmatpush.msra.mxu0 %v63
    %94 = vmatmul.f32.gmra.mxu0 %v73
    %v95 = vpop.f32.mrf.mxu0
    %v96 = vadd.f32 0.0, %v95
    %97 = vmatmul.f32.gmra.mxu0 %v76
    %v98 = vpop.f32.mrf.mxu0
    %v99 = vadd.f32 0.0, %v98
    %100 = vdwg.mxu0
    %v102 = vsel %vm71, %v50, 0
    %v105 = vsel %vm71, %v51, 0
    %107 = vmatpush.msra.mxu0 0.0
    %108 = vmatpush.msra.mxu0 0.0
    %109 = vmatpush.msra.mxu0 0.0
    %110 = vmatpush.msra.mxu0 0.0
    %111 = vmatpush.msra.mxu0 0.0
    %112 = vmatpush.msra.mxu0 0.0
    %113 = vmatpush.msra.mxu0 0.0
    %114 = vmatpush.msra.mxu0 0.0
    %115 = vmatpush.msra.mxu0 %v59
    %116 = vmatpush.msra.mxu0 %v58
    %117 = vmatpush.msra.mxu0 %v57
    %118 = vmatpush.msra.mxu0 %v56
    %119 = vmatpush.msra.mxu0 %v55
    %120 = vmatpush.msra.mxu0 %v54
    %121 = vmatpush.msra.mxu0 %v53
    %122 = vmatpush.msra.mxu0 %v52
    %123 = vmatmul.f32.gmra.mxu0 %v102
    %v124 = vpop.f32.mrf.mxu0
    %v125 = vadd.f32 %v96, %v124
    %126 = vmatmul.f32.gmra.mxu0 %v105
    %v127 = vpop.f32.mrf.mxu0
    %v128 = vadd.f32 %v99, %v127
    %129 = vdwg.mxu0
    %v130 = vld [vmem:[%s0 + $0x2] sm:$0xff]
    %v131 = vld [vmem:[%s0 + $0xa] sm:$0xff]
    %s132 = scalar_lea.vmem %s1, 128
    %v133 = vld [vmem:[%s132] sm:$0xff]
    %v134 = vld [vmem:[%s132 + $0x8] sm:$0xff]
    %v135 = vld [vmem:[%s132 + $0x10] sm:$0xff]
    %v136 = vld [vmem:[%s132 + $0x18] sm:$0xff]
    %v137 = vld [vmem:[%s132 + $0x20] sm:$0xff]
    %v138 = vld [vmem:[%s132 + $0x28] sm:$0xff]
    %v139 = vld [vmem:[%s132 + $0x30] sm:$0xff]
    %v140 = vld [vmem:[%s132 + $0x38] sm:$0xff]
    %v142 = vsel %vm71, %v130, 0
    %v145 = vsel %vm71, %v131, 0
    %147 = vmatpush.msra.mxu0 0.0
    %148 = vmatpush.msra.mxu0 0.0
    %149 = vmatpush.msra.mxu0 0.0
    %150 = vmatpush.msra.mxu0 0.0
    %151 = vmatpush.msra.mxu0 0.0
    %152 = vmatpush.msra.mxu0 0.0
    %153 = vmatpush.msra.mxu0 0.0
    %154 = vmatpush.msra.mxu0 0.0
    %155 = vmatpush.msra.mxu0 %v140
    %156 = vmatpush.msra.mxu0 %v139
    %157 = vmatpush.msra.mxu0 %v138
    %158 = vmatpush.msra.mxu0 %v137
    %159 = vmatpush.msra.mxu0 %v136
    %160 = vmatpush.msra.mxu0 %v135
    %161 = vmatpush.msra.mxu0 %v134
    %162 = vmatpush.msra.mxu0 %v133
    %163 = vmatmul.f32.gmra.mxu0 %v142
    %v164 = vpop.f32.mrf.mxu0
    %v165 = vadd.f32 0.0, %v164
    %166 = vmatmul.f32.gmra.mxu0 %v145
    %v167 = vpop.f32.mrf.mxu0
    %v168 = vadd.f32 0.0, %v167
    %169 = vdwg.mxu0
    %v170 = vadd.f32 %v125, %v165
    %v171 = vadd.f32 %v128, %v168
    %v173 = vperm.slane %v47, 0
    %v175 = vadd.f32 %v170, %v173
    %v176 = vadd.f32 %v171, %v173
    %v177 = vmax.f32 %v175, 0.0
    %v178 = vmax.f32 %v176, 0.0
    %179 = vst [vmem:[#allocation2 + $0x1] sm:$0xff] %v177
    %180 = vst [vmem:[#allocation2 + $0x9] sm:$0xff] %v178
    %v181 = vld [vmem:[%s0 + $0x12] sm:$0xff]
    %v182 = vld [vmem:[%s0 + $0x1a] sm:$0xff]
    %v183 = vld [vmem:[%s1] sm:$0xff]
    %v184 = vld [vmem:[%s1 + $0x8] sm:$0xff]
    %v185 = vld [vmem:[%s1 + $0x10] sm:$0xff]
    %v186 = vld [vmem:[%s1 + $0x18] sm:$0xff]
    %v187 = vld [vmem:[%s1 + $0x20] sm:$0xff]
    %v188 = vld [vmem:[%s1 + $0x28] sm:$0xff]
    %v189 = vld [vmem:[%s1 + $0x30] sm:$0xff]
    %v190 = vld [vmem:[%s1 + $0x38] sm:$0xff]
    %v191 = vld [vmem:[%s0 + $0x13] sm:$0xff]
    %v192 = vld [vmem:[%s0 + $0x1b] sm:$0xff]
    %v193 = vld [vmem:[%s62] sm:$0xff]
    %v194 = vld [vmem:[%s62 + $0x8] sm:$0xff]
    %v195 = vld [vmem:[%s62 + $0x10] sm:$0xff]
    %v196 = vld [vmem:[%s62 + $0x18] sm:$0xff]
    %v197 = vld [vmem:[%s62 + $0x20] sm:$0xff]
    %v198 = vld [vmem:[%s62 + $0x28] sm:$0xff]
    %v199 = vld [vmem:[%s62 + $0x30] sm:$0xff]
    %v200 = vld [vmem:[%s62 + $0x38] sm:$0xff]
    %v202 = vsel %vm71, %v191, 0
    %v205 = vsel %vm71, %v192, 0
    %207 = vmatpush.msra.mxu0 0.0
    %208 = vmatpush.msra.mxu0 0.0
    %209 = vmatpush.msra.mxu0 0.0
    %210 = vmatpush.msra.mxu0 0.0
    %211 = vmatpush.msra.mxu0 0.0
    %212 = vmatpush.msra.mxu0 0.0
    %213 = vmatpush.msra.mxu0 0.0
    %214 = vmatpush.msra.mxu0 0.0
    %215 = vmatpush.msra.mxu0 %v200
    %216 = vmatpush.msra.mxu0 %v199
    %217 = vmatpush.msra.mxu0 %v198
    %218 = vmatpush.msra.mxu0 %v197
    %219 = vmatpush.msra.mxu0 %v196
    %220 = vmatpush.msra.mxu0 %v195
    %221 = vmatpush.msra.mxu0 %v194
    %222 = vmatpush.msra.mxu0 %v193
    %223 = vmatmul.f32.gmra.mxu0 %v202
    %v224 = vpop.f32.mrf.mxu0
    %v225 = vadd.f32 0.0, %v224
    %226 = vmatmul.f32.gmra.mxu0 %v205
    %v227 = vpop.f32.mrf.mxu0
    %v228 = vadd.f32 0.0, %v227
    %229 = vdwg.mxu0
    %v231 = vsel %vm71, %v181, 0
    %v234 = vsel %vm71, %v182, 0
    %236 = vmatpush.msra.mxu0 0.0
    %237 = vmatpush.msra.mxu0 0.0
    %238 = vmatpush.msra.mxu0 0.0
    %239 = vmatpush.msra.mxu0 0.0
    %240 = vmatpush.msra.mxu0 0.0
    %241 = vmatpush.msra.mxu0 0.0
    %242 = vmatpush.msra.mxu0 0.0
    %243 = vmatpush.msra.mxu0 0.0
    %244 = vmatpush.msra.mxu0 %v190
    %245 = vmatpush.msra.mxu0 %v189
    %246 = vmatpush.msra.mxu0 %v188
    %247 = vmatpush.msra.mxu0 %v187
    %248 = vmatpush.msra.mxu0 %v186
    %249 = vmatpush.msra.mxu0 %v185
    %250 = vmatpush.msra.mxu0 %v184
    %251 = vmatpush.msra.mxu0 %v183
    %252 = vmatmul.f32.gmra.mxu0 %v231
    %v253 = vpop.f32.mrf.mxu0
    %v254 = vadd.f32 %v225, %v253
    %255 = vmatmul.f32.gmra.mxu0 %v234
    %v256 = vpop.f32.mrf.mxu0
    %v257 = vadd.f32 %v228, %v256
    %258 = vdwg.mxu0
    %v259 = vld [vmem:[%s0 + $0x14] sm:$0xff]
    %v260 = vld [vmem:[%s0 + $0x1c] sm:$0xff]
    %v261 = vld [vmem:[%s132] sm:$0xff]
    %v262 = vld [vmem:[%s132 + $0x8] sm:$0xff]
    %v263 = vld [vmem:[%s132 + $0x10] sm:$0xff]
    %v264 = vld [vmem:[%s132 + $0x18] sm:$0xff]
    %v265 = vld [vmem:[%s132 + $0x20] sm:$0xff]
    %v266 = vld [vmem:[%s132 + $0x28] sm:$0xff]
    %v267 = vld [vmem:[%s132 + $0x30] sm:$0xff]
    %v268 = vld [vmem:[%s132 + $0x38] sm:$0xff]
    %v270 = vsel %vm71, %v259, 0
    %v273 = vsel %vm71, %v260, 0
    %275 = vmatpush.msra.mxu0 0.0
    %276 = vmatpush.msra.mxu0 0.0
    %277 = vmatpush.msra.mxu0 0.0
    %278 = vmatpush.msra.mxu0 0.0
    %279 = vmatpush.msra.mxu0 0.0
    %280 = vmatpush.msra.mxu0 0.0
    %281 = vmatpush.msra.mxu0 0.0
    %282 = vmatpush.msra.mxu0 0.0
    %283 = vmatpush.msra.mxu0 %v268
    %284 = vmatpush.msra.mxu0 %v267
    %285 = vmatpush.msra.mxu0 %v266
    %286 = vmatpush.msra.mxu0 %v265
    %287 = vmatpush.msra.mxu0 %v264
    %288 = vmatpush.msra.mxu0 %v263
    %289 = vmatpush.msra.mxu0 %v262
    %290 = vmatpush.msra.mxu0 %v261
    %291 = vmatmul.f32.gmra.mxu0 %v270
    %v292 = vpop.f32.mrf.mxu0
    %v293 = vadd.f32 0.0, %v292
    %294 = vmatmul.f32.gmra.mxu0 %v273
    %v295 = vpop.f32.mrf.mxu0
    %v296 = vadd.f32 0.0, %v295
    %297 = vdwg.mxu0
    %v298 = vadd.f32 %v254, %v293
    %v299 = vadd.f32 %v257, %v296
    %v300 = vadd.f32 %v298, %v173
    %v301 = vadd.f32 %v299, %v173
    %v302 = vmax.f32 %v300, 0.0
    %v303 = vmax.f32 %v301, 0.0
    %304 = vst [vmem:[#allocation2 + $0x13] sm:$0xff] %v302
    %305 = vst [vmem:[#allocation2 + $0x1b] sm:$0xff] %v303
    %v306 = vld [vmem:[#allocation2] ss:$2 sm:$0xff]
    %v307 = vld [vmem:[%s3] sm:$0xff]
    %v308 = vld [vmem:[%s3 + $0x8] sm:$0xff]
    %v309 = vld [vmem:[%s3 + $0x10] sm:$0xff]
    %v310 = vld [vmem:[%s3 + $0x18] sm:$0xff]
    %v311 = vld [vmem:[%s3 + $0x20] sm:$0xff]
    %v312 = vld [vmem:[%s3 + $0x28] sm:$0xff]
    %v313 = vld [vmem:[%s3 + $0x30] sm:$0xff]
    %v314 = vld [vmem:[%s3 + $0x38] sm:$0xff]
    %v315 = vld [vmem:[%s3 + $0x40] sm:$0xff]
    %v316 = vld [vmem:[%s3 + $0x48] sm:$0xff]
    %v317 = vld [vmem:[%s3 + $0x50] sm:$0xff]
    %v318 = vld [vmem:[%s3 + $0x58] sm:$0xff]
    %v319 = vld [vmem:[%s3 + $0x60] sm:$0xff]
    %v320 = vld [vmem:[%s3 + $0x68] sm:$0xff]
    %v321 = vld [vmem:[%s3 + $0x70] sm:$0xff]
    %v322 = vld [vmem:[%s3 + $0x78] sm:$0xff]
    %s323 = scalar_lea.vmem [#allocation2], 1
    %v324 = vld [vmem:[%s323] ss:$2 sm:$0xff]
    %s325 = scalar_lea.vmem %s3, 128
    %v326 = vld [vmem:[%s325] sm:$0xff]
    %v327 = vld [vmem:[%s325 + $0x8] sm:$0xff]
    %v328 = vld [vmem:[%s325 + $0x10] sm:$0xff]
    %v329 = vld [vmem:[%s325 + $0x18] sm:$0xff]
    %v330 = vld [vmem:[%s325 + $0x20] sm:$0xff]
    %v331 = vld [vmem:[%s325 + $0x28] sm:$0xff]
    %v332 = vld [vmem:[%s325 + $0x30] sm:$0xff]
    %v333 = vld [vmem:[%s325 + $0x38] sm:$0xff]
    %v334 = vld [vmem:[%s325 + $0x40] sm:$0xff]
    %v335 = vld [vmem:[%s325 + $0x48] sm:$0xff]
    %v336 = vld [vmem:[%s325 + $0x50] sm:$0xff]
    %v337 = vld [vmem:[%s325 + $0x58] sm:$0xff]
    %v338 = vld [vmem:[%s325 + $0x60] sm:$0xff]
    %v339 = vld [vmem:[%s325 + $0x68] sm:$0xff]
    %v340 = vld [vmem:[%s325 + $0x70] sm:$0xff]
    %v341 = vld [vmem:[%s325 + $0x78] sm:$0xff]
    %342 = vmatpush.msra.mxu0 %v341
    %343 = vmatpush.msra.mxu0 %v340
    %344 = vmatpush.msra.mxu0 %v339
    %345 = vmatpush.msra.mxu0 %v338
    %346 = vmatpush.msra.mxu0 %v337
    %347 = vmatpush.msra.mxu0 %v336
    %348 = vmatpush.msra.mxu0 %v335
    %349 = vmatpush.msra.mxu0 %v334
    %350 = vmatpush.msra.mxu0 %v333
    %351 = vmatpush.msra.mxu0 %v332
    %352 = vmatpush.msra.mxu0 %v331
    %353 = vmatpush.msra.mxu0 %v330
    %354 = vmatpush.msra.mxu0 %v329
    %355 = vmatpush.msra.mxu0 %v328
    %356 = vmatpush.msra.mxu0 %v327
    %357 = vmatpush.msra.mxu0 %v326
    %358 = vmatmul.f32.gmra.mxu0 %v324
    %v359 = vpop.f32.mrf.mxu0
    %v360 = vadd.f32 0.0, %v359
    %361 = vdwg.mxu0
    %362 = vmatpush.msra.mxu0 %v322
    %363 = vmatpush.msra.mxu0 %v321
    %364 = vmatpush.msra.mxu0 %v320
    %365 = vmatpush.msra.mxu0 %v319
    %366 = vmatpush.msra.mxu0 %v318
    %367 = vmatpush.msra.mxu0 %v317
    %368 = vmatpush.msra.mxu0 %v316
    %369 = vmatpush.msra.mxu0 %v315
    %370 = vmatpush.msra.mxu0 %v314
    %371 = vmatpush.msra.mxu0 %v313
    %372 = vmatpush.msra.mxu0 %v312
    %373 = vmatpush.msra.mxu0 %v311
    %374 = vmatpush.msra.mxu0 %v310
    %375 = vmatpush.msra.mxu0 %v309
    %376 = vmatpush.msra.mxu0 %v308
    %377 = vmatpush.msra.mxu0 %v307
    %378 = vmatmul.f32.gmra.mxu0 %v306
    %v379 = vpop.f32.mrf.mxu0
    %v380 = vadd.f32 %v360, %v379
    %381 = vdwg.mxu0
    %s382 = scalar_lea.vmem [#allocation2], 2
    %v383 = vld [vmem:[%s382] ss:$2 sm:$0xff]
    %s384 = scalar_lea.vmem %s3, 256
    %v385 = vld [vmem:[%s384] sm:$0xff]
    %v386 = vld [vmem:[%s384 + $0x8] sm:$0xff]
    %v387 = vld [vmem:[%s384 + $0x10] sm:$0xff]
    %v388 = vld [vmem:[%s384 + $0x18] sm:$0xff]
    %v389 = vld [vmem:[%s384 + $0x20] sm:$0xff]
    %v390 = vld [vmem:[%s384 + $0x28] sm:$0xff]
    %v391 = vld [vmem:[%s384 + $0x30] sm:$0xff]
    %v392 = vld [vmem:[%s384 + $0x38] sm:$0xff]
    %v393 = vld [vmem:[%s384 + $0x40] sm:$0xff]
    %v394 = vld [vmem:[%s384 + $0x48] sm:$0xff]
    %v395 = vld [vmem:[%s384 + $0x50] sm:$0xff]
    %v396 = vld [vmem:[%s384 + $0x58] sm:$0xff]
    %v397 = vld [vmem:[%s384 + $0x60] sm:$0xff]
    %v398 = vld [vmem:[%s384 + $0x68] sm:$0xff]
    %v399 = vld [vmem:[%s384 + $0x70] sm:$0xff]
    %v400 = vld [vmem:[%s384 + $0x78] sm:$0xff]
    %401 = vmatpush.msra.mxu0 %v400
    %402 = vmatpush.msra.mxu0 %v399
    %403 = vmatpush.msra.mxu0 %v398
    %404 = vmatpush.msra.mxu0 %v397
    %405 = vmatpush.msra.mxu0 %v396
    %406 = vmatpush.msra.mxu0 %v395
    %407 = vmatpush.msra.mxu0 %v394
    %408 = vmatpush.msra.mxu0 %v393
    %409 = vmatpush.msra.mxu0 %v392
    %410 = vmatpush.msra.mxu0 %v391
    %411 = vmatpush.msra.mxu0 %v390
    %412 = vmatpush.msra.mxu0 %v389
    %413 = vmatpush.msra.mxu0 %v388
    %414 = vmatpush.msra.mxu0 %v387
    %415 = vmatpush.msra.mxu0 %v386
    %416 = vmatpush.msra.mxu0 %v385
    %417 = vmatmul.f32.gmra.mxu0 %v383
    %v418 = vpop.f32.mrf.mxu0
    %v419 = vadd.f32 0.0, %v418
    %420 = vdwg.mxu0
    %v421 = vadd.f32 %v380, %v419
    %v423 = vperm.slane %v48, 0
    %v425 = vadd.f32 %v421, %v423
    %v426 = vmax.f32 %v425, 0.0
    %427 = vst [vmem:[#allocation3 + $0x1] sm:$0xff] %v426
    %s428 = scalar_lea.vmem [#allocation2], 18
    %v429 = vld [vmem:[%s428] ss:$2 sm:$0xff]
    %v430 = vld [vmem:[%s3] sm:$0xff]
    %v431 = vld [vmem:[%s3 + $0x8] sm:$0xff]
    %v432 = vld [vmem:[%s3 + $0x10] sm:$0xff]
    %v433 = vld [vmem:[%s3 + $0x18] sm:$0xff]
    %v434 = vld [vmem:[%s3 + $0x20] sm:$0xff]
    %v435 = vld [vmem:[%s3 + $0x28] sm:$0xff]
    %v436 = vld [vmem:[%s3 + $0x30] sm:$0xff]
    %v437 = vld [vmem:[%s3 + $0x38] sm:$0xff]
    %v438 = vld [vmem:[%s3 + $0x40] sm:$0xff]
    %v439 = vld [vmem:[%s3 + $0x48] sm:$0xff]
    %v440 = vld [vmem:[%s3 + $0x50] sm:$0xff]
    %v441 = vld [vmem:[%s3 + $0x58] sm:$0xff]
    %v442 = vld [vmem:[%s3 + $0x60] sm:$0xff]
    %v443 = vld [vmem:[%s3 + $0x68] sm:$0xff]
    %v444 = vld [vmem:[%s3 + $0x70] sm:$0xff]
    %v445 = vld [vmem:[%s3 + $0x78] sm:$0xff]
    %s446 = scalar_lea.vmem [#allocation2], 19
    %v447 = vld [vmem:[%s446] ss:$2 sm:$0xff]
    %v448 = vld [vmem:[%s325] sm:$0xff]
    %v449 = vld [vmem:[%s325 + $0x8] sm:$0xff]
    %v450 = vld [vmem:[%s325 + $0x10] sm:$0xff]
    %v451 = vld [vmem:[%s325 + $0x18] sm:$0xff]
    %v452 = vld [vmem:[%s325 + $0x20] sm:$0xff]
    %v453 = vld [vmem:[%s325 + $0x28] sm:$0xff]
    %v454 = vld [vmem:[%s325 + $0x30] sm:$0xff]
    %v455 = vld [vmem:[%s325 + $0x38] sm:$0xff]
    %v456 = vld [vmem:[%s325 + $0x40] sm:$0xff]
    %v457 = vld [vmem:[%s325 + $0x48] sm:$0xff]
    %v458 = vld [vmem:[%s325 + $0x50] sm:$0xff]
    %v459 = vld [vmem:[%s325 + $0x58] sm:$0xff]
    %v460 = vld [vmem:[%s325 + $0x60] sm:$0xff]
    %v461 = vld [vmem:[%s325 + $0x68] sm:$0xff]
    %v462 = vld [vmem:[%s325 + $0x70] sm:$0xff]
    %v463 = vld [vmem:[%s325 + $0x78] sm:$0xff]
    %464 = vmatpush.msra.mxu0 %v463
    %465 = vmatpush.msra.mxu0 %v462
    %466 = vmatpush.msra.mxu0 %v461
    %467 = vmatpush.msra.mxu0 %v460
    %468 = vmatpush.msra.mxu0 %v459
    %469 = vmatpush.msra.mxu0 %v458
    %470 = vmatpush.msra.mxu0 %v457
    %471 = vmatpush.msra.mxu0 %v456
    %472 = vmatpush.msra.mxu0 %v455
    %473 = vmatpush.msra.mxu0 %v454
    %474 = vmatpush.msra.mxu0 %v453
    %475 = vmatpush.msra.mxu0 %v452
    %476 = vmatpush.msra.mxu0 %v451
    %477 = vmatpush.msra.mxu0 %v450
    %478 = vmatpush.msra.mxu0 %v449
    %479 = vmatpush.msra.mxu0 %v448
    %480 = vmatmul.f32.gmra.mxu0 %v447
    %v481 = vpop.f32.mrf.mxu0
    %v482 = vadd.f32 0.0, %v481
    %483 = vdwg.mxu0
    %484 = vmatpush.msra.mxu0 %v445
    %485 = vmatpush.msra.mxu0 %v444
    %486 = vmatpush.msra.mxu0 %v443
    %487 = vmatpush.msra.mxu0 %v442
    %488 = vmatpush.msra.mxu0 %v441
    %489 = vmatpush.msra.mxu0 %v440
    %490 = vmatpush.msra.mxu0 %v439
    %491 = vmatpush.msra.mxu0 %v438
    %492 = vmatpush.msra.mxu0 %v437
    %493 = vmatpush.msra.mxu0 %v436
    %494 = vmatpush.msra.mxu0 %v435
    %495 = vmatpush.msra.mxu0 %v434
    %496 = vmatpush.msra.mxu0 %v433
    %497 = vmatpush.msra.mxu0 %v432
    %498 = vmatpush.msra.mxu0 %v431
    %499 = vmatpush.msra.mxu0 %v430
    %500 = vmatmul.f32.gmra.mxu0 %v429
    %v501 = vpop.f32.mrf.mxu0
    %v502 = vadd.f32 %v482, %v501
    %503 = vdwg.mxu0
    %s504 = scalar_lea.vmem [#allocation2], 20
    %v505 = vld [vmem:[%s504] ss:$2 sm:$0xff]
    %v506 = vld [vmem:[%s384] sm:$0xff]
    %v507 = vld [vmem:[%s384 + $0x8] sm:$0xff]
    %v508 = vld [vmem:[%s384 + $0x10] sm:$0xff]
    %v509 = vld [vmem:[%s384 + $0x18] sm:$0xff]
    %v510 = vld [vmem:[%s384 + $0x20] sm:$0xff]
    %v511 = vld [vmem:[%s384 + $0x28] sm:$0xff]
    %v512 = vld [vmem:[%s384 + $0x30] sm:$0xff]
    %v513 = vld [vmem:[%s384 + $0x38] sm:$0xff]
    %v514 = vld [vmem:[%s384 + $0x40] sm:$0xff]
    %v515 = vld [vmem:[%s384 + $0x48] sm:$0xff]
    %v516 = vld [vmem:[%s384 + $0x50] sm:$0xff]
    %v517 = vld [vmem:[%s384 + $0x58] sm:$0xff]
    %v518 = vld [vmem:[%s384 + $0x60] sm:$0xff]
    %v519 = vld [vmem:[%s384 + $0x68] sm:$0xff]
    %v520 = vld [vmem:[%s384 + $0x70] sm:$0xff]
    %v521 = vld [vmem:[%s384 + $0x78] sm:$0xff]
    %522 = vmatpush.msra.mxu0 %v521
    %523 = vmatpush.msra.mxu0 %v520
    %524 = vmatpush.msra.mxu0 %v519
    %525 = vmatpush.msra.mxu0 %v518
    %526 = vmatpush.msra.mxu0 %v517
    %527 = vmatpush.msra.mxu0 %v516
    %528 = vmatpush.msra.mxu0 %v515
    %529 = vmatpush.msra.mxu0 %v514
    %530 = vmatpush.msra.mxu0 %v513
    %531 = vmatpush.msra.mxu0 %v512
    %532 = vmatpush.msra.mxu0 %v511
    %533 = vmatpush.msra.mxu0 %v510
    %534 = vmatpush.msra.mxu0 %v509
    %535 = vmatpush.msra.mxu0 %v508
    %536 = vmatpush.msra.mxu0 %v507
    %537 = vmatpush.msra.mxu0 %v506
    %538 = vmatmul.f32.gmra.mxu0 %v505
    %v539 = vpop.f32.mrf.mxu0
    %v540 = vadd.f32 0.0, %v539
    %541 = vdwg.mxu0
    %v542 = vadd.f32 %v502, %v540
    %v543 = vadd.f32 %v542, %v423
    %v544 = vmax.f32 %v543, 0.0
    %545 = vst [vmem:[#allocation3 + $0xb] sm:$0xff] %v544
    %v546 = vld [vmem:[#allocation3] ss:$2 sm:$0xf]
    %v547 = vld [vmem:[%s5] sm:$0xff]
    %v548 = vld [vmem:[%s5 + $0x8] sm:$0xff]
    %v549 = vld [vmem:[%s5 + $0x10] sm:$0xff]
    %v550 = vld [vmem:[%s5 + $0x18] sm:$0xff]
    %v551 = vld [vmem:[%s5 + $0x20] sm:$0xff]
    %v552 = vld [vmem:[%s5 + $0x28] sm:$0xff]
    %v553 = vld [vmem:[%s5 + $0x30] sm:$0xff]
    %v554 = vld [vmem:[%s5 + $0x38] sm:$0xff]
    %v555 = vld [vmem:[%s5 + $0x40] sm:$0xff]
    %v556 = vld [vmem:[%s5 + $0x48] sm:$0xff]
    %v557 = vld [vmem:[%s5 + $0x50] sm:$0xff]
    %v558 = vld [vmem:[%s5 + $0x58] sm:$0xff]
    %v559 = vld [vmem:[%s5 + $0x60] sm:$0xff]
    %v560 = vld [vmem:[%s5 + $0x68] sm:$0xff]
    %v561 = vld [vmem:[%s5 + $0x70] sm:$0xff]
    %v562 = vld [vmem:[%s5 + $0x78] sm:$0xff]
    %s563 = scalar_lea.vmem [#allocation3], 1
    %v564 = vld [vmem:[%s563] ss:$2 sm:$0xf]
    %s565 = scalar_lea.vmem %s5, 128
    %v566 = vld [vmem:[%s565] sm:$0xff]
    %v567 = vld [vmem:[%s565 + $0x8] sm:$0xff]
    %v568 = vld [vmem:[%s565 + $0x10] sm:$0xff]
    %v569 = vld [vmem:[%s565 + $0x18] sm:$0xff]
    %v570 = vld [vmem:[%s565 + $0x20] sm:$0xff]
    %v571 = vld [vmem:[%s565 + $0x28] sm:$0xff]
    %v572 = vld [vmem:[%s565 + $0x30] sm:$0xff]
    %v573 = vld [vmem:[%s565 + $0x38] sm:$0xff]
    %v574 = vld [vmem:[%s565 + $0x40] sm:$0xff]
    %v575 = vld [vmem:[%s565 + $0x48] sm:$0xff]
    %v576 = vld [vmem:[%s565 + $0x50] sm:$0xff]
    %v577 = vld [vmem:[%s565 + $0x58] sm:$0xff]
    %v578 = vld [vmem:[%s565 + $0x60] sm:$0xff]
    %v579 = vld [vmem:[%s565 + $0x68] sm:$0xff]
    %v580 = vld [vmem:[%s565 + $0x70] sm:$0xff]
    %v581 = vld [vmem:[%s565 + $0x78] sm:$0xff]
    %582 = vmatpush.msra.mxu0 %v581
    %583 = vmatpush.msra.mxu0 %v580
    %584 = vmatpush.msra.mxu0 %v579
    %585 = vmatpush.msra.mxu0 %v578
    %586 = vmatpush.msra.mxu0 %v577
    %587 = vmatpush.msra.mxu0 %v576
    %588 = vmatpush.msra.mxu0 %v575
    %589 = vmatpush.msra.mxu0 %v574
    %590 = vmatpush.msra.mxu0 %v573
    %591 = vmatpush.msra.mxu0 %v572
    %592 = vmatpush.msra.mxu0 %v571
    %593 = vmatpush.msra.mxu0 %v570
    %594 = vmatpush.msra.mxu0 %v569
    %595 = vmatpush.msra.mxu0 %v568
    %596 = vmatpush.msra.mxu0 %v567
    %597 = vmatpush.msra.mxu0 %v566
    %598 = vmatmul.f32.gmra.mxu0 %v564
    %v599 = vpop.f32.mrf.mxu0
    %v600 = vadd.f32 0.0, %v599
    %601 = vdwg.mxu0
    %602 = vmatpush.msra.mxu0 %v562
    %603 = vmatpush.msra.mxu0 %v561
    %604 = vmatpush.msra.mxu0 %v560
    %605 = vmatpush.msra.mxu0 %v559
    %606 = vmatpush.msra.mxu0 %v558
    %607 = vmatpush.msra.mxu0 %v557
    %608 = vmatpush.msra.mxu0 %v556
    %609 = vmatpush.msra.mxu0 %v555
    %610 = vmatpush.msra.mxu0 %v554
    %611 = vmatpush.msra.mxu0 %v553
    %612 = vmatpush.msra.mxu0 %v552
    %613 = vmatpush.msra.mxu0 %v551
    %614 = vmatpush.msra.mxu0 %v550
    %615 = vmatpush.msra.mxu0 %v549
    %616 = vmatpush.msra.mxu0 %v548
    %617 = vmatpush.msra.mxu0 %v547
    %618 = vmatmul.f32.gmra.mxu0 %v546
    %v619 = vpop.f32.mrf.mxu0
    %v620 = vadd.f32 %v600, %v619
    %621 = vdwg.mxu0
    %s622 = scalar_lea.vmem [#allocation3], 2
    %v623 = vld [vmem:[%s622] ss:$2 sm:$0xf]
    %s624 = scalar_lea.vmem %s5, 256
    %v625 = vld [vmem:[%s624] sm:$0xff]
    %v626 = vld [vmem:[%s624 + $0x8] sm:$0xff]
    %v627 = vld [vmem:[%s624 + $0x10] sm:$0xff]
    %v628 = vld [vmem:[%s624 + $0x18] sm:$0xff]
    %v629 = vld [vmem:[%s624 + $0x20] sm:$0xff]
    %v630 = vld [vmem:[%s624 + $0x28] sm:$0xff]
    %v631 = vld [vmem:[%s624 + $0x30] sm:$0xff]
    %v632 = vld [vmem:[%s624 + $0x38] sm:$0xff]
    %v633 = vld [vmem:[%s624 + $0x40] sm:$0xff]
    %v634 = vld [vmem:[%s624 + $0x48] sm:$0xff]
    %v635 = vld [vmem:[%s624 + $0x50] sm:$0xff]
    %v636 = vld [vmem:[%s624 + $0x58] sm:$0xff]
    %v637 = vld [vmem:[%s624 + $0x60] sm:$0xff]
    %v638 = vld [vmem:[%s624 + $0x68] sm:$0xff]
    %v639 = vld [vmem:[%s624 + $0x70] sm:$0xff]
    %v640 = vld [vmem:[%s624 + $0x78] sm:$0xff]
    %641 = vmatpush.msra.mxu0 %v640
    %642 = vmatpush.msra.mxu0 %v639
    %643 = vmatpush.msra.mxu0 %v638
    %644 = vmatpush.msra.mxu0 %v637
    %645 = vmatpush.msra.mxu0 %v636
    %646 = vmatpush.msra.mxu0 %v635
    %647 = vmatpush.msra.mxu0 %v634
    %648 = vmatpush.msra.mxu0 %v633
    %649 = vmatpush.msra.mxu0 %v632
    %650 = vmatpush.msra.mxu0 %v631
    %651 = vmatpush.msra.mxu0 %v630
    %652 = vmatpush.msra.mxu0 %v629
    %653 = vmatpush.msra.mxu0 %v628
    %654 = vmatpush.msra.mxu0 %v627
    %655 = vmatpush.msra.mxu0 %v626
    %656 = vmatpush.msra.mxu0 %v625
    %657 = vmatmul.f32.gmra.mxu0 %v623
    %v658 = vpop.f32.mrf.mxu0
    %v659 = vadd.f32 0.0, %v658
    %660 = vdwg.mxu0
    %v661 = vadd.f32 %v620, %v659
    %v663 = vperm.slane %v49, 0
    %v665 = vadd.f32 %v661, %v663
    %v666 = vmax.f32 %v665, 0.0
    %s667 = scalar_lea.vmem [#allocation3], 10
    %v668 = vld [vmem:[%s667] ss:$2 sm:$0xf]
    %s669 = scalar_lea.vmem [#allocation3], 11
    %v670 = vld [vmem:[%s669] ss:$2 sm:$0xf]
    %671 = vmatpush.msra.mxu0 %v581
    %672 = vmatpush.msra.mxu0 %v580
    %673 = vmatpush.msra.mxu0 %v579
    %674 = vmatpush.msra.mxu0 %v578
    %675 = vmatpush.msra.mxu0 %v577
    %676 = vmatpush.msra.mxu0 %v576
    %677 = vmatpush.msra.mxu0 %v575
    %678 = vmatpush.msra.mxu0 %v574
    %679 = vmatpush.msra.mxu0 %v573
    %680 = vmatpush.msra.mxu0 %v572
    %681 = vmatpush.msra.mxu0 %v571
    %682 = vmatpush.msra.mxu0 %v570
    %683 = vmatpush.msra.mxu0 %v569
    %684 = vmatpush.msra.mxu0 %v568
    %685 = vmatpush.msra.mxu0 %v567
    %686 = vmatpush.msra.mxu0 %v566
    %687 = vmatmul.f32.gmra.mxu0 %v670
    %v688 = vpop.f32.mrf.mxu0
    %v689 = vadd.f32 0.0, %v688
    %690 = vdwg.mxu0
    %691 = vmatpush.msra.mxu0 %v562
    %692 = vmatpush.msra.mxu0 %v561
    %693 = vmatpush.msra.mxu0 %v560
    %694 = vmatpush.msra.mxu0 %v559
    %695 = vmatpush.msra.mxu0 %v558
    %696 = vmatpush.msra.mxu0 %v557
    %697 = vmatpush.msra.mxu0 %v556
    %698 = vmatpush.msra.mxu0 %v555
    %699 = vmatpush.msra.mxu0 %v554
    %700 = vmatpush.msra.mxu0 %v553
    %701 = vmatpush.msra.mxu0 %v552
    %702 = vmatpush.msra.mxu0 %v551
    %703 = vmatpush.msra.mxu0 %v550
    %704 = vmatpush.msra.mxu0 %v549
    %705 = vmatpush.msra.mxu0 %v548
    %706 = vmatpush.msra.mxu0 %v547
    %707 = vmatmul.f32.gmra.mxu0 %v668
    %v708 = vpop.f32.mrf.mxu0
    %v709 = vadd.f32 %v689, %v708
    %710 = vdwg.mxu0
    %s711 = scalar_lea.vmem [#allocation3], 12
    %v712 = vld [vmem:[%s711] ss:$2 sm:$0xf]
    %713 = vmatpush.msra.mxu0 %v640
    %714 = vmatpush.msra.mxu0 %v639
    %715 = vmatpush.msra.mxu0 %v638
    %716 = vmatpush.msra.mxu0 %v637
    %717 = vmatpush.msra.mxu0 %v636
    %718 = vmatpush.msra.mxu0 %v635
    %719 = vmatpush.msra.mxu0 %v634
    %720 = vmatpush.msra.mxu0 %v633
    %721 = vmatpush.msra.mxu0 %v632
    %722 = vmatpush.msra.mxu0 %v631
    %723 = vmatpush.msra.mxu0 %v630
    %724 = vmatpush.msra.mxu0 %v629
    %725 = vmatpush.msra.mxu0 %v628
    %726 = vmatpush.msra.mxu0 %v627
    %727 = vmatpush.msra.mxu0 %v626
    %728 = vmatpush.msra.mxu0 %v625
    %729 = vmatmul.f32.gmra.mxu0 %v712
    %v730 = vpop.f32.mrf.mxu0
    %v731 = vadd.f32 0.0, %v730
    %732 = vdwg.mxu0
    %v733 = vadd.f32 %v709, %v731
    %v734 = vadd.f32 %v733, %v663
    %v735 = vmax.f32 %v734, 0.0
    %v736 = vld [vmem:[%s8] sm:$0x1]
    %v738 = vrot.slane %v735, 7
    %vm740 = vcmask 1040384
    %v741 = vsel %vm740, %v666, %v738
    %v742 = vld [vmem:[%s7] sm:$0xff]
    %v743 = vld [vmem:[%s7 + $0x8] sm:$0xff]
    %v744 = vld [vmem:[%s7 + $0x10] sm:$0xff]
    %v745 = vld [vmem:[%s7 + $0x18] sm:$0xff]
    %v746 = vld [vmem:[%s7 + $0x20] sm:$0xff]
    %v747 = vld [vmem:[%s7 + $0x28] sm:$0xff]
    %v748 = vld [vmem:[%s7 + $0x30] sm:$0xff]
    %v749 = vld [vmem:[%s7 + $0x38] sm:$0xff]
    %v751 = vsel %vm71, %v741, 0
    %753 = vmatpush.msra.mxu0 0.0
    %754 = vmatpush.msra.mxu0 0.0
    %755 = vmatpush.msra.mxu0 0.0
    %756 = vmatpush.msra.mxu0 0.0
    %757 = vmatpush.msra.mxu0 0.0
    %758 = vmatpush.msra.mxu0 0.0
    %759 = vmatpush.msra.mxu0 0.0
    %760 = vmatpush.msra.mxu0 0.0
    %v761 = vand.u32 %v749, 4294901760
    %762 = vmatpush.msra.mxu0 %v761
    %v763 = vand.u32 %v748, 4294901760
    %764 = vmatpush.msra.mxu0 %v763
    %v765 = vand.u32 %v747, 4294901760
    %766 = vmatpush.msra.mxu0 %v765
    %v767 = vand.u32 %v746, 4294901760
    %768 = vmatpush.msra.mxu0 %v767
    %v769 = vand.u32 %v745, 4294901760
    %770 = vmatpush.msra.mxu0 %v769
    %v771 = vand.u32 %v744, 4294901760
    %772 = vmatpush.msra.mxu0 %v771
    %v773 = vand.u32 %v743, 4294901760
    %774 = vmatpush.msra.mxu0 %v773
    %v775 = vand.u32 %v742, 4294901760
    %776 = vmatpush.msra.mxu0 %v775
    %v777 = vand.u32 %v751, 4294901760
    %v778 = vsub.f32 %v751, %v777
    %v779 = vand.u32 %v778, 4294901760
    %v780 = vsub.f32 %v778, %v779
    %v781 = vand.u32 %v780, 4294901760
    %782 = vmatmul.f32.gmra.mxu0 %v781
    %v783 = vpop.f32.mrf.mxu0
    %v784 = vadd.f32 0.0, %v783
    %785 = vdwg.mxu0
    %786 = vmatpush.msra.mxu0 0.0
    %787 = vmatpush.msra.mxu0 0.0
    %788 = vmatpush.msra.mxu0 0.0
    %789 = vmatpush.msra.mxu0 0.0
    %790 = vmatpush.msra.mxu0 0.0
    %791 = vmatpush.msra.mxu0 0.0
    %792 = vmatpush.msra.mxu0 0.0
    %793 = vmatpush.msra.mxu0 0.0
    %v794 = vand.u32 %v749, 4294901760
    %v795 = vsub.f32 %v749, %v794
    %v796 = vand.u32 %v795, 4294901760
    %v797 = vsub.f32 %v795, %v796
    %v798 = vand.u32 %v797, 4294901760
    %799 = vmatpush.msra.mxu0 %v798
    %v800 = vand.u32 %v748, 4294901760
    %v801 = vsub.f32 %v748, %v800
    %v802 = vand.u32 %v801, 4294901760
    %v803 = vsub.f32 %v801, %v802
    %v804 = vand.u32 %v803, 4294901760
    %805 = vmatpush.msra.mxu0 %v804
    %v806 = vand.u32 %v747, 4294901760
    %v807 = vsub.f32 %v747, %v806
    %v808 = vand.u32 %v807, 4294901760
    %v809 = vsub.f32 %v807, %v808
    %v810 = vand.u32 %v809, 4294901760
    %811 = vmatpush.msra.mxu0 %v810
    %v812 = vand.u32 %v746, 4294901760
    %v813 = vsub.f32 %v746, %v812
    %v814 = vand.u32 %v813, 4294901760
    %v815 = vsub.f32 %v813, %v814
    %v816 = vand.u32 %v815, 4294901760
    %817 = vmatpush.msra.mxu0 %v816
    %v818 = vand.u32 %v745, 4294901760
    %v819 = vsub.f32 %v745, %v818
    %v820 = vand.u32 %v819, 4294901760
    %v821 = vsub.f32 %v819, %v820
    %v822 = vand.u32 %v821, 4294901760
    %823 = vmatpush.msra.mxu0 %v822
    %v824 = vand.u32 %v744, 4294901760
    %v825 = vsub.f32 %v744, %v824
    %v826 = vand.u32 %v825, 4294901760
    %v827 = vsub.f32 %v825, %v826
    %v828 = vand.u32 %v827, 4294901760
    %829 = vmatpush.msra.mxu0 %v828
    %v830 = vand.u32 %v743, 4294901760
    %v831 = vsub.f32 %v743, %v830
    %v832 = vand.u32 %v831, 4294901760
    %v833 = vsub.f32 %v831, %v832
    %v834 = vand.u32 %v833, 4294901760
    %835 = vmatpush.msra.mxu0 %v834
    %v836 = vand.u32 %v742, 4294901760
    %v837 = vsub.f32 %v742, %v836
    %v838 = vand.u32 %v837, 4294901760
    %v839 = vsub.f32 %v837, %v838
    %v840 = vand.u32 %v839, 4294901760
    %841 = vmatpush.msra.mxu0 %v840
    %v842 = vand.u32 %v751, 4294901760
    %843 = vmatmul.f32.gmra.mxu0 %v842
    %v844 = vpop.f32.mrf.mxu0
    %v845 = vadd.f32 %v784, %v844
    %846 = vdwg.mxu0
    %847 = vmatpush.msra.mxu0 0.0
    %848 = vmatpush.msra.mxu0 0.0
    %849 = vmatpush.msra.mxu0 0.0
    %850 = vmatpush.msra.mxu0 0.0
    %851 = vmatpush.msra.mxu0 0.0
    %852 = vmatpush.msra.mxu0 0.0
    %853 = vmatpush.msra.mxu0 0.0
    %854 = vmatpush.msra.mxu0 0.0
    %v855 = vand.u32 %v749, 4294901760
    %v856 = vsub.f32 %v749, %v855
    %857 = vmatpush.msra.mxu0 %v856
    %v858 = vand.u32 %v748, 4294901760
    %v859 = vsub.f32 %v748, %v858
    %860 = vmatpush.msra.mxu0 %v859
    %v861 = vand.u32 %v747, 4294901760
    %v862 = vsub.f32 %v747, %v861
    %863 = vmatpush.msra.mxu0 %v862
    %v864 = vand.u32 %v746, 4294901760
    %v865 = vsub.f32 %v746, %v864
    %866 = vmatpush.msra.mxu0 %v865
    %v867 = vand.u32 %v745, 4294901760
    %v868 = vsub.f32 %v745, %v867
    %869 = vmatpush.msra.mxu0 %v868
    %v870 = vand.u32 %v744, 4294901760
    %v871 = vsub.f32 %v744, %v870
    %872 = vmatpush.msra.mxu0 %v871
    %v873 = vand.u32 %v743, 4294901760
    %v874 = vsub.f32 %v743, %v873
    %875 = vmatpush.msra.mxu0 %v874
    %v876 = vand.u32 %v742, 4294901760
    %v877 = vsub.f32 %v742, %v876
    %878 = vmatpush.msra.mxu0 %v877
    %v879 = vand.u32 %v751, 4294901760
    %v880 = vsub.f32 %v751, %v879
    %881 = vmatmul.f32.gmra.mxu0 %v880
    %v882 = vpop.f32.mrf.mxu0
    %v883 = vadd.f32 %v845, %v882
    %884 = vdwg.mxu0
    %885 = vmatpush.msra.mxu0 0.0
    %886 = vmatpush.msra.mxu0 0.0
    %887 = vmatpush.msra.mxu0 0.0
    %888 = vmatpush.msra.mxu0 0.0
    %889 = vmatpush.msra.mxu0 0.0
    %890 = vmatpush.msra.mxu0 0.0
    %891 = vmatpush.msra.mxu0 0.0
    %892 = vmatpush.msra.mxu0 0.0
    %v893 = vand.u32 %v749, 4294901760
    %894 = vmatpush.msra.mxu0 %v893
    %v895 = vand.u32 %v748, 4294901760
    %896 = vmatpush.msra.mxu0 %v895
    %v897 = vand.u32 %v747, 4294901760
    %898 = vmatpush.msra.mxu0 %v897
    %v899 = vand.u32 %v746, 4294901760
    %900 = vmatpush.msra.mxu0 %v899
    %v901 = vand.u32 %v745, 4294901760
    %902 = vmatpush.msra.mxu0 %v901
    %v903 = vand.u32 %v744, 4294901760
    %904 = vmatpush.msra.mxu0 %v903
    %v905 = vand.u32 %v743, 4294901760
    %906 = vmatpush.msra.mxu0 %v905
    %v907 = vand.u32 %v742, 4294901760
    %908 = vmatpush.msra.mxu0 %v907
    %v909 = vand.u32 %v751, 4294901760
    %v910 = vsub.f32 %v751, %v909
    %v911 = vand.u32 %v910, 4294901760
    %912 = vmatmul.f32.gmra.mxu0 %v911
    %v913 = vpop.f32.mrf.mxu0
    %v914 = vadd.f32 %v883, %v913
    %915 = vdwg.mxu0
    %916 = vmatpush.msra.mxu0 0.0
    %917 = vmatpush.msra.mxu0 0.0
    %918 = vmatpush.msra.mxu0 0.0
    %919 = vmatpush.msra.mxu0 0.0
    %920 = vmatpush.msra.mxu0 0.0
    %921 = vmatpush.msra.mxu0 0.0
    %922 = vmatpush.msra.mxu0 0.0
    %923 = vmatpush.msra.mxu0 0.0
    %v924 = vand.u32 %v749, 4294901760
    %v925 = vsub.f32 %v749, %v924
    %v926 = vand.u32 %v925, 4294901760
    %927 = vmatpush.msra.mxu0 %v926
    %v928 = vand.u32 %v748, 4294901760
    %v929 = vsub.f32 %v748, %v928
    %v930 = vand.u32 %v929, 4294901760
    %931 = vmatpush.msra.mxu0 %v930
    %v932 = vand.u32 %v747, 4294901760
    %v933 = vsub.f32 %v747, %v932
    %v934 = vand.u32 %v933, 4294901760
    %935 = vmatpush.msra.mxu0 %v934
    %v936 = vand.u32 %v746, 4294901760
    %v937 = vsub.f32 %v746, %v936
    %v938 = vand.u32 %v937, 4294901760
    %939 = vmatpush.msra.mxu0 %v938
    %v940 = vand.u32 %v745, 4294901760
    %v941 = vsub.f32 %v745, %v940
    %v942 = vand.u32 %v941, 4294901760
    %943 = vmatpush.msra.mxu0 %v942
    %v944 = vand.u32 %v744, 4294901760
    %v945 = vsub.f32 %v744, %v944
    %v946 = vand.u32 %v945, 4294901760
    %947 = vmatpush.msra.mxu0 %v946
    %v948 = vand.u32 %v743, 4294901760
    %v949 = vsub.f32 %v743, %v948
    %v950 = vand.u32 %v949, 4294901760
    %951 = vmatpush.msra.mxu0 %v950
    %v952 = vand.u32 %v742, 4294901760
    %v953 = vsub.f32 %v742, %v952
    %v954 = vand.u32 %v953, 4294901760
    %955 = vmatpush.msra.mxu0 %v954
    %v956 = vand.u32 %v751, 4294901760
    %957 = vmatmul.f32.gmra.mxu0 %v956
    %v958 = vpop.f32.mrf.mxu0
    %v959 = vadd.f32 %v914, %v958
    %960 = vdwg.mxu0
    %961 = vmatpush.msra.mxu0 0.0
    %962 = vmatpush.msra.mxu0 0.0
    %963 = vmatpush.msra.mxu0 0.0
    %964 = vmatpush.msra.mxu0 0.0
    %965 = vmatpush.msra.mxu0 0.0
    %966 = vmatpush.msra.mxu0 0.0
    %967 = vmatpush.msra.mxu0 0.0
    %968 = vmatpush.msra.mxu0 0.0
    %v969 = vand.u32 %v749, 4294901760
    %970 = vmatpush.msra.mxu0 %v969
    %v971 = vand.u32 %v748, 4294901760
    %972 = vmatpush.msra.mxu0 %v971
    %v973 = vand.u32 %v747, 4294901760
    %974 = vmatpush.msra.mxu0 %v973
    %v975 = vand.u32 %v746, 4294901760
    %976 = vmatpush.msra.mxu0 %v975
    %v977 = vand.u32 %v745, 4294901760
    %978 = vmatpush.msra.mxu0 %v977
    %v979 = vand.u32 %v744, 4294901760
    %980 = vmatpush.msra.mxu0 %v979
    %v981 = vand.u32 %v743, 4294901760
    %982 = vmatpush.msra.mxu0 %v981
    %v983 = vand.u32 %v742, 4294901760
    %984 = vmatpush.msra.mxu0 %v983
    %v985 = vand.u32 %v751, 4294901760
    %986 = vmatmul.f32.gmra.mxu0 %v985
    %v987 = vpop.f32.mrf.mxu0
    %v988 = vadd.f32 %v959, %v987
    %989 = vdwg.mxu0
    %v991 = vperm.slane %v736, 0
    %v993 = vadd.f32 %v991, %v988
    %v995 = vrot.slane %v666, 1
    %v997 = vsel %vm740, %v995, %v735
    %s998 = scalar_lea.vmem %s7, 64
    %v999 = vld [vmem:[%s998] sm:$0xff]
    %v1000 = vld [vmem:[%s998 + $0x8] sm:$0xff]
    %v1001 = vld [vmem:[%s998 + $0x10] sm:$0xff]
    %v1002 = vld [vmem:[%s998 + $0x18] sm:$0xff]
    %v1003 = vld [vmem:[%s998 + $0x20] sm:$0xff]
    %v1004 = vld [vmem:[%s998 + $0x28] sm:$0xff]
    %v1005 = vld [vmem:[%s998 + $0x30] sm:$0xff]
    %v1006 = vld [vmem:[%s998 + $0x38] sm:$0xff]
    %v1008 = vsel %vm71, %v997, 0
    %1010 = vmatpush.msra.mxu0 0.0
    %1011 = vmatpush.msra.mxu0 0.0
    %1012 = vmatpush.msra.mxu0 0.0
    %1013 = vmatpush.msra.mxu0 0.0
    %1014 = vmatpush.msra.mxu0 0.0
    %1015 = vmatpush.msra.mxu0 0.0
    %1016 = vmatpush.msra.mxu0 0.0
    %1017 = vmatpush.msra.mxu0 0.0
    %v1018 = vand.u32 %v1006, 4294901760
    %1019 = vmatpush.msra.mxu0 %v1018
    %v1020 = vand.u32 %v1005, 4294901760
    %1021 = vmatpush.msra.mxu0 %v1020
    %v1022 = vand.u32 %v1004, 4294901760
    %1023 = vmatpush.msra.mxu0 %v1022
    %v1024 = vand.u32 %v1003, 4294901760
    %1025 = vmatpush.msra.mxu0 %v1024
    %v1026 = vand.u32 %v1002, 4294901760
    %1027 = vmatpush.msra.mxu0 %v1026
    %v1028 = vand.u32 %v1001, 4294901760
    %1029 = vmatpush.msra.mxu0 %v1028
    %v1030 = vand.u32 %v1000, 4294901760
    %1031 = vmatpush.msra.mxu0 %v1030
    %v1032 = vand.u32 %v999, 4294901760
    %1033 = vmatpush.msra.mxu0 %v1032
    %v1034 = vand.u32 %v1008, 4294901760
    %v1035 = vsub.f32 %v1008, %v1034
    %v1036 = vand.u32 %v1035, 4294901760
    %v1037 = vsub.f32 %v1035, %v1036
    %v1038 = vand.u32 %v1037, 4294901760
    %1039 = vmatmul.f32.gmra.mxu0 %v1038
    %v1040 = vpop.f32.mrf.mxu0
    %v1041 = vadd.f32 0.0, %v1040
    %1042 = vdwg.mxu0
    %1043 = vmatpush.msra.mxu0 0.0
    %1044 = vmatpush.msra.mxu0 0.0
    %1045 = vmatpush.msra.mxu0 0.0
    %1046 = vmatpush.msra.mxu0 0.0
    %1047 = vmatpush.msra.mxu0 0.0
    %1048 = vmatpush.msra.mxu0 0.0
    %1049 = vmatpush.msra.mxu0 0.0
    %1050 = vmatpush.msra.mxu0 0.0
    %v1051 = vand.u32 %v1006, 4294901760
    %v1052 = vsub.f32 %v1006, %v1051
    %v1053 = vand.u32 %v1052, 4294901760
    %v1054 = vsub.f32 %v1052, %v1053
    %v1055 = vand.u32 %v1054, 4294901760
    %1056 = vmatpush.msra.mxu0 %v1055
    %v1057 = vand.u32 %v1005, 4294901760
    %v1058 = vsub.f32 %v1005, %v1057
    %v1059 = vand.u32 %v1058, 4294901760
    %v1060 = vsub.f32 %v1058, %v1059
    %v1061 = vand.u32 %v1060, 4294901760
    %1062 = vmatpush.msra.mxu0 %v1061
    %v1063 = vand.u32 %v1004, 4294901760
    %v1064 = vsub.f32 %v1004, %v1063
    %v1065 = vand.u32 %v1064, 4294901760
    %v1066 = vsub.f32 %v1064, %v1065
    %v1067 = vand.u32 %v1066, 4294901760
    %1068 = vmatpush.msra.mxu0 %v1067
    %v1069 = vand.u32 %v1003, 4294901760
    %v1070 = vsub.f32 %v1003, %v1069
    %v1071 = vand.u32 %v1070, 4294901760
    %v1072 = vsub.f32 %v1070, %v1071
    %v1073 = vand.u32 %v1072, 4294901760
    %1074 = vmatpush.msra.mxu0 %v1073
    %v1075 = vand.u32 %v1002, 4294901760
    %v1076 = vsub.f32 %v1002, %v1075
    %v1077 = vand.u32 %v1076, 4294901760
    %v1078 = vsub.f32 %v1076, %v1077
    %v1079 = vand.u32 %v1078, 4294901760
    %1080 = vmatpush.msra.mxu0 %v1079
    %v1081 = vand.u32 %v1001, 4294901760
    %v1082 = vsub.f32 %v1001, %v1081
    %v1083 = vand.u32 %v1082, 4294901760
    %v1084 = vsub.f32 %v1082, %v1083
    %v1085 = vand.u32 %v1084, 4294901760
    %1086 = vmatpush.msra.mxu0 %v1085
    %v1087 = vand.u32 %v1000, 4294901760
    %v1088 = vsub.f32 %v1000, %v1087
    %v1089 = vand.u32 %v1088, 4294901760
    %v1090 = vsub.f32 %v1088, %v1089
    %v1091 = vand.u32 %v1090, 4294901760
    %1092 = vmatpush.msra.mxu0 %v1091
    %v1093 = vand.u32 %v999, 4294901760
    %v1094 = vsub.f32 %v999, %v1093
    %v1095 = vand.u32 %v1094, 4294901760
    %v1096 = vsub.f32 %v1094, %v1095
    %v1097 = vand.u32 %v1096, 4294901760
    %1098 = vmatpush.msra.mxu0 %v1097
    %v1099 = vand.u32 %v1008, 4294901760
    %1100 = vmatmul.f32.gmra.mxu0 %v1099
    %v1101 = vpop.f32.mrf.mxu0
    %v1102 = vadd.f32 %v1041, %v1101
    %1103 = vdwg.mxu0
    %1104 = vmatpush.msra.mxu0 0.0
    %1105 = vmatpush.msra.mxu0 0.0
    %1106 = vmatpush.msra.mxu0 0.0
    %1107 = vmatpush.msra.mxu0 0.0
    %1108 = vmatpush.msra.mxu0 0.0
    %1109 = vmatpush.msra.mxu0 0.0
    %1110 = vmatpush.msra.mxu0 0.0
    %1111 = vmatpush.msra.mxu0 0.0
    %v1112 = vand.u32 %v1006, 4294901760
    %v1113 = vsub.f32 %v1006, %v1112
    %1114 = vmatpush.msra.mxu0 %v1113
    %v1115 = vand.u32 %v1005, 4294901760
    %v1116 = vsub.f32 %v1005, %v1115
    %1117 = vmatpush.msra.mxu0 %v1116
    %v1118 = vand.u32 %v1004, 4294901760
    %v1119 = vsub.f32 %v1004, %v1118
    %1120 = vmatpush.msra.mxu0 %v1119
    %v1121 = vand.u32 %v1003, 4294901760
    %v1122 = vsub.f32 %v1003, %v1121
    %1123 = vmatpush.msra.mxu0 %v1122
    %v1124 = vand.u32 %v1002, 4294901760
    %v1125 = vsub.f32 %v1002, %v1124
    %1126 = vmatpush.msra.mxu0 %v1125
    %v1127 = vand.u32 %v1001, 4294901760
    %v1128 = vsub.f32 %v1001, %v1127
    %1129 = vmatpush.msra.mxu0 %v1128
    %v1130 = vand.u32 %v1000, 4294901760
    %v1131 = vsub.f32 %v1000, %v1130
    %1132 = vmatpush.msra.mxu0 %v1131
    %v1133 = vand.u32 %v999, 4294901760
    %v1134 = vsub.f32 %v999, %v1133
    %1135 = vmatpush.msra.mxu0 %v1134
    %v1136 = vand.u32 %v1008, 4294901760
    %v1137 = vsub.f32 %v1008, %v1136
    %1138 = vmatmul.f32.gmra.mxu0 %v1137
    %v1139 = vpop.f32.mrf.mxu0
    %v1140 = vadd.f32 %v1102, %v1139
    %1141 = vdwg.mxu0
    %1142 = vmatpush.msra.mxu0 0.0
    %1143 = vmatpush.msra.mxu0 0.0
    %1144 = vmatpush.msra.mxu0 0.0
    %1145 = vmatpush.msra.mxu0 0.0
    %1146 = vmatpush.msra.mxu0 0.0
    %1147 = vmatpush.msra.mxu0 0.0
    %1148 = vmatpush.msra.mxu0 0.0
    %1149 = vmatpush.msra.mxu0 0.0
    %v1150 = vand.u32 %v1006, 4294901760
    %1151 = vmatpush.msra.mxu0 %v1150
    %v1152 = vand.u32 %v1005, 4294901760
    %1153 = vmatpush.msra.mxu0 %v1152
    %v1154 = vand.u32 %v1004, 4294901760
    %1155 = vmatpush.msra.mxu0 %v1154
    %v1156 = vand.u32 %v1003, 4294901760
    %1157 = vmatpush.msra.mxu0 %v1156
    %v1158 = vand.u32 %v1002, 4294901760
    %1159 = vmatpush.msra.mxu0 %v1158
    %v1160 = vand.u32 %v1001, 4294901760
    %1161 = vmatpush.msra.mxu0 %v1160
    %v1162 = vand.u32 %v1000, 4294901760
    %1163 = vmatpush.msra.mxu0 %v1162
    %v1164 = vand.u32 %v999, 4294901760
    %1165 = vmatpush.msra.mxu0 %v1164
    %v1166 = vand.u32 %v1008, 4294901760
    %v1167 = vsub.f32 %v1008, %v1166
    %v1168 = vand.u32 %v1167, 4294901760
    %1169 = vmatmul.f32.gmra.mxu0 %v1168
    %v1170 = vpop.f32.mrf.mxu0
    %v1171 = vadd.f32 %v1140, %v1170
    %1172 = vdwg.mxu0
    %1173 = vmatpush.msra.mxu0 0.0
    %1174 = vmatpush.msra.mxu0 0.0
    %1175 = vmatpush.msra.mxu0 0.0
    %1176 = vmatpush.msra.mxu0 0.0
    %1177 = vmatpush.msra.mxu0 0.0
    %1178 = vmatpush.msra.mxu0 0.0
    %1179 = vmatpush.msra.mxu0 0.0
    %1180 = vmatpush.msra.mxu0 0.0
    %v1181 = vand.u32 %v1006, 4294901760
    %v1182 = vsub.f32 %v1006, %v1181
    %v1183 = vand.u32 %v1182, 4294901760
    %1184 = vmatpush.msra.mxu0 %v1183
    %v1185 = vand.u32 %v1005, 4294901760
    %v1186 = vsub.f32 %v1005, %v1185
    %v1187 = vand.u32 %v1186, 4294901760
    %1188 = vmatpush.msra.mxu0 %v1187
    %v1189 = vand.u32 %v1004, 4294901760
    %v1190 = vsub.f32 %v1004, %v1189
    %v1191 = vand.u32 %v1190, 4294901760
    %1192 = vmatpush.msra.mxu0 %v1191
    %v1193 = vand.u32 %v1003, 4294901760
    %v1194 = vsub.f32 %v1003, %v1193
    %v1195 = vand.u32 %v1194, 4294901760
    %1196 = vmatpush.msra.mxu0 %v1195
    %v1197 = vand.u32 %v1002, 4294901760
    %v1198 = vsub.f32 %v1002, %v1197
    %v1199 = vand.u32 %v1198, 4294901760
    %1200 = vmatpush.msra.mxu0 %v1199
    %v1201 = vand.u32 %v1001, 4294901760
    %v1202 = vsub.f32 %v1001, %v1201
    %v1203 = vand.u32 %v1202, 4294901760
    %1204 = vmatpush.msra.mxu0 %v1203
    %v1205 = vand.u32 %v1000, 4294901760
    %v1206 = vsub.f32 %v1000, %v1205
    %v1207 = vand.u32 %v1206, 4294901760
    %1208 = vmatpush.msra.mxu0 %v1207
    %v1209 = vand.u32 %v999, 4294901760
    %v1210 = vsub.f32 %v999, %v1209
    %v1211 = vand.u32 %v1210, 4294901760
    %1212 = vmatpush.msra.mxu0 %v1211
    %v1213 = vand.u32 %v1008, 4294901760
    %1214 = vmatmul.f32.gmra.mxu0 %v1213
    %v1215 = vpop.f32.mrf.mxu0
    %v1216 = vadd.f32 %v1171, %v1215
    %1217 = vdwg.mxu0
    %1218 = vmatpush.msra.mxu0 0.0
    %1219 = vmatpush.msra.mxu0 0.0
    %1220 = vmatpush.msra.mxu0 0.0
    %1221 = vmatpush.msra.mxu0 0.0
    %1222 = vmatpush.msra.mxu0 0.0
    %1223 = vmatpush.msra.mxu0 0.0
    %1224 = vmatpush.msra.mxu0 0.0
    %1225 = vmatpush.msra.mxu0 0.0
    %v1226 = vand.u32 %v1006, 4294901760
    %1227 = vmatpush.msra.mxu0 %v1226
    %v1228 = vand.u32 %v1005, 4294901760
    %1229 = vmatpush.msra.mxu0 %v1228
    %v1230 = vand.u32 %v1004, 4294901760
    %1231 = vmatpush.msra.mxu0 %v1230
    %v1232 = vand.u32 %v1003, 4294901760
    %1233 = vmatpush.msra.mxu0 %v1232
    %v1234 = vand.u32 %v1002, 4294901760
    %1235 = vmatpush.msra.mxu0 %v1234
    %v1236 = vand.u32 %v1001, 4294901760
    %1237 = vmatpush.msra.mxu0 %v1236
    %v1238 = vand.u32 %v1000, 4294901760
    %1239 = vmatpush.msra.mxu0 %v1238
    %v1240 = vand.u32 %v999, 4294901760
    %1241 = vmatpush.msra.mxu0 %v1240
    %v1242 = vand.u32 %v1008, 4294901760
    %1243 = vmatmul.f32.gmra.mxu0 %v1242
    %v1244 = vpop.f32.mrf.mxu0
    %v1245 = vadd.f32 %v1216, %v1244
    %1246 = vdwg.mxu0
    %v1247 = vadd.f32 %v993, %v1245
    %v1248 = vrot.slane %v666, 2
    %v1250 = vrot.slane %v735, 1
    %v1252 = vsel %vm740, %v1248, %v1250
    %s1253 = scalar_lea.vmem %s7, 128
    %v1254 = vld [vmem:[%s1253] sm:$0xff]
    %v1255 = vld [vmem:[%s1253 + $0x8] sm:$0xff]
    %v1256 = vld [vmem:[%s1253 + $0x10] sm:$0xff]
    %v1257 = vld [vmem:[%s1253 + $0x18] sm:$0xff]
    %v1258 = vld [vmem:[%s1253 + $0x20] sm:$0xff]
    %v1259 = vld [vmem:[%s1253 + $0x28] sm:$0xff]
    %v1260 = vld [vmem:[%s1253 + $0x30] sm:$0xff]
    %v1261 = vld [vmem:[%s1253 + $0x38] sm:$0xff]
    %v1263 = vsel %vm71, %v1252, 0
    %1265 = vmatpush.msra.mxu0 0.0
    %1266 = vmatpush.msra.mxu0 0.0
    %1267 = vmatpush.msra.mxu0 0.0
    %1268 = vmatpush.msra.mxu0 0.0
    %1269 = vmatpush.msra.mxu0 0.0
    %1270 = vmatpush.msra.mxu0 0.0
    %1271 = vmatpush.msra.mxu0 0.0
    %1272 = vmatpush.msra.mxu0 0.0
    %v1273 = vand.u32 %v1261, 4294901760
    %1274 = vmatpush.msra.mxu0 %v1273
    %v1275 = vand.u32 %v1260, 4294901760
    %1276 = vmatpush.msra.mxu0 %v1275
    %v1277 = vand.u32 %v1259, 4294901760
    %1278 = vmatpush.msra.mxu0 %v1277
    %v1279 = vand.u32 %v1258, 4294901760
    %1280 = vmatpush.msra.mxu0 %v1279
    %v1281 = vand.u32 %v1257, 4294901760
    %1282 = vmatpush.msra.mxu0 %v1281
    %v1283 = vand.u32 %v1256, 4294901760
    %1284 = vmatpush.msra.mxu0 %v1283
    %v1285 = vand.u32 %v1255, 4294901760
    %1286 = vmatpush.msra.mxu0 %v1285
    %v1287 = vand.u32 %v1254, 4294901760
    %1288 = vmatpush.msra.mxu0 %v1287
    %v1289 = vand.u32 %v1263, 4294901760
    %v1290 = vsub.f32 %v1263, %v1289
    %v1291 = vand.u32 %v1290, 4294901760
    %v1292 = vsub.f32 %v1290, %v1291
    %v1293 = vand.u32 %v1292, 4294901760
    %1294 = vmatmul.f32.gmra.mxu0 %v1293
    %v1295 = vpop.f32.mrf.mxu0
    %v1296 = vadd.f32 0.0, %v1295
    %1297 = vdwg.mxu0
    %1298 = vmatpush.msra.mxu0 0.0
    %1299 = vmatpush.msra.mxu0 0.0
    %1300 = vmatpush.msra.mxu0 0.0
    %1301 = vmatpush.msra.mxu0 0.0
    %1302 = vmatpush.msra.mxu0 0.0
    %1303 = vmatpush.msra.mxu0 0.0
    %1304 = vmatpush.msra.mxu0 0.0
    %1305 = vmatpush.msra.mxu0 0.0
    %v1306 = vand.u32 %v1261, 4294901760
    %v1307 = vsub.f32 %v1261, %v1306
    %v1308 = vand.u32 %v1307, 4294901760
    %v1309 = vsub.f32 %v1307, %v1308
    %v1310 = vand.u32 %v1309, 4294901760
    %1311 = vmatpush.msra.mxu0 %v1310
    %v1312 = vand.u32 %v1260, 4294901760
    %v1313 = vsub.f32 %v1260, %v1312
    %v1314 = vand.u32 %v1313, 4294901760
    %v1315 = vsub.f32 %v1313, %v1314
    %v1316 = vand.u32 %v1315, 4294901760
    %1317 = vmatpush.msra.mxu0 %v1316
    %v1318 = vand.u32 %v1259, 4294901760
    %v1319 = vsub.f32 %v1259, %v1318
    %v1320 = vand.u32 %v1319, 4294901760
    %v1321 = vsub.f32 %v1319, %v1320
    %v1322 = vand.u32 %v1321, 4294901760
    %1323 = vmatpush.msra.mxu0 %v1322
    %v1324 = vand.u32 %v1258, 4294901760
    %v1325 = vsub.f32 %v1258, %v1324
    %v1326 = vand.u32 %v1325, 4294901760
    %v1327 = vsub.f32 %v1325, %v1326
    %v1328 = vand.u32 %v1327, 4294901760
    %1329 = vmatpush.msra.mxu0 %v1328
    %v1330 = vand.u32 %v1257, 4294901760
    %v1331 = vsub.f32 %v1257, %v1330
    %v1332 = vand.u32 %v1331, 4294901760
    %v1333 = vsub.f32 %v1331, %v1332
    %v1334 = vand.u32 %v1333, 4294901760
    %1335 = vmatpush.msra.mxu0 %v1334
    %v1336 = vand.u32 %v1256, 4294901760
    %v1337 = vsub.f32 %v1256, %v1336
    %v1338 = vand.u32 %v1337, 4294901760
    %v1339 = vsub.f32 %v1337, %v1338
    %v1340 = vand.u32 %v1339, 4294901760
    %1341 = vmatpush.msra.mxu0 %v1340
    %v1342 = vand.u32 %v1255, 4294901760
    %v1343 = vsub.f32 %v1255, %v1342
    %v1344 = vand.u32 %v1343, 4294901760
    %v1345 = vsub.f32 %v1343, %v1344
    %v1346 = vand.u32 %v1345, 4294901760
    %1347 = vmatpush.msra.mxu0 %v1346
    %v1348 = vand.u32 %v1254, 4294901760
    %v1349 = vsub.f32 %v1254, %v1348
    %v1350 = vand.u32 %v1349, 4294901760
    %v1351 = vsub.f32 %v1349, %v1350
    %v1352 = vand.u32 %v1351, 4294901760
    %1353 = vmatpush.msra.mxu0 %v1352
    %v1354 = vand.u32 %v1263, 4294901760
    %1355 = vmatmul.f32.gmra.mxu0 %v1354
    %v1356 = vpop.f32.mrf.mxu0
    %v1357 = vadd.f32 %v1296, %v1356
    %1358 = vdwg.mxu0
    %1359 = vmatpush.msra.mxu0 0.0
    %1360 = vmatpush.msra.mxu0 0.0
    %1361 = vmatpush.msra.mxu0 0.0
    %1362 = vmatpush.msra.mxu0 0.0
    %1363 = vmatpush.msra.mxu0 0.0
    %1364 = vmatpush.msra.mxu0 0.0
    %1365 = vmatpush.msra.mxu0 0.0
    %1366 = vmatpush.msra.mxu0 0.0
    %v1367 = vand.u32 %v1261, 4294901760
    %v1368 = vsub.f32 %v1261, %v1367
    %1369 = vmatpush.msra.mxu0 %v1368
    %v1370 = vand.u32 %v1260, 4294901760
    %v1371 = vsub.f32 %v1260, %v1370
    %1372 = vmatpush.msra.mxu0 %v1371
    %v1373 = vand.u32 %v1259, 4294901760
    %v1374 = vsub.f32 %v1259, %v1373
    %1375 = vmatpush.msra.mxu0 %v1374
    %v1376 = vand.u32 %v1258, 4294901760
    %v1377 = vsub.f32 %v1258, %v1376
    %1378 = vmatpush.msra.mxu0 %v1377
    %v1379 = vand.u32 %v1257, 4294901760
    %v1380 = vsub.f32 %v1257, %v1379
    %1381 = vmatpush.msra.mxu0 %v1380
    %v1382 = vand.u32 %v1256, 4294901760
    %v1383 = vsub.f32 %v1256, %v1382
    %1384 = vmatpush.msra.mxu0 %v1383
    %v1385 = vand.u32 %v1255, 4294901760
    %v1386 = vsub.f32 %v1255, %v1385
    %1387 = vmatpush.msra.mxu0 %v1386
    %v1388 = vand.u32 %v1254, 4294901760
    %v1389 = vsub.f32 %v1254, %v1388
    %1390 = vmatpush.msra.mxu0 %v1389
    %v1391 = vand.u32 %v1263, 4294901760
    %v1392 = vsub.f32 %v1263, %v1391
    %1393 = vmatmul.f32.gmra.mxu0 %v1392
    %v1394 = vpop.f32.mrf.mxu0
    %v1395 = vadd.f32 %v1357, %v1394
    %1396 = vdwg.mxu0
    %1397 = vmatpush.msra.mxu0 0.0
    %1398 = vmatpush.msra.mxu0 0.0
    %1399 = vmatpush.msra.mxu0 0.0
    %1400 = vmatpush.msra.mxu0 0.0
    %1401 = vmatpush.msra.mxu0 0.0
    %1402 = vmatpush.msra.mxu0 0.0
    %1403 = vmatpush.msra.mxu0 0.0
    %1404 = vmatpush.msra.mxu0 0.0
    %v1405 = vand.u32 %v1261, 4294901760
    %1406 = vmatpush.msra.mxu0 %v1405
    %v1407 = vand.u32 %v1260, 4294901760
    %1408 = vmatpush.msra.mxu0 %v1407
    %v1409 = vand.u32 %v1259, 4294901760
    %1410 = vmatpush.msra.mxu0 %v1409
    %v1411 = vand.u32 %v1258, 4294901760
    %1412 = vmatpush.msra.mxu0 %v1411
    %v1413 = vand.u32 %v1257, 4294901760
    %1414 = vmatpush.msra.mxu0 %v1413
    %v1415 = vand.u32 %v1256, 4294901760
    %1416 = vmatpush.msra.mxu0 %v1415
    %v1417 = vand.u32 %v1255, 4294901760
    %1418 = vmatpush.msra.mxu0 %v1417
    %v1419 = vand.u32 %v1254, 4294901760
    %1420 = vmatpush.msra.mxu0 %v1419
    %v1421 = vand.u32 %v1263, 4294901760
    %v1422 = vsub.f32 %v1263, %v1421
    %v1423 = vand.u32 %v1422, 4294901760
    %1424 = vmatmul.f32.gmra.mxu0 %v1423
    %v1425 = vpop.f32.mrf.mxu0
    %v1426 = vadd.f32 %v1395, %v1425
    %1427 = vdwg.mxu0
    %1428 = vmatpush.msra.mxu0 0.0
    %1429 = vmatpush.msra.mxu0 0.0
    %1430 = vmatpush.msra.mxu0 0.0
    %1431 = vmatpush.msra.mxu0 0.0
    %1432 = vmatpush.msra.mxu0 0.0
    %1433 = vmatpush.msra.mxu0 0.0
    %1434 = vmatpush.msra.mxu0 0.0
    %1435 = vmatpush.msra.mxu0 0.0
    %v1436 = vand.u32 %v1261, 4294901760
    %v1437 = vsub.f32 %v1261, %v1436
    %v1438 = vand.u32 %v1437, 4294901760
    %1439 = vmatpush.msra.mxu0 %v1438
    %v1440 = vand.u32 %v1260, 4294901760
    %v1441 = vsub.f32 %v1260, %v1440
    %v1442 = vand.u32 %v1441, 4294901760
    %1443 = vmatpush.msra.mxu0 %v1442
    %v1444 = vand.u32 %v1259, 4294901760
    %v1445 = vsub.f32 %v1259, %v1444
    %v1446 = vand.u32 %v1445, 4294901760
    %1447 = vmatpush.msra.mxu0 %v1446
    %v1448 = vand.u32 %v1258, 4294901760
    %v1449 = vsub.f32 %v1258, %v1448
    %v1450 = vand.u32 %v1449, 4294901760
    %1451 = vmatpush.msra.mxu0 %v1450
    %v1452 = vand.u32 %v1257, 4294901760
    %v1453 = vsub.f32 %v1257, %v1452
    %v1454 = vand.u32 %v1453, 4294901760
    %1455 = vmatpush.msra.mxu0 %v1454
    %v1456 = vand.u32 %v1256, 4294901760
    %v1457 = vsub.f32 %v1256, %v1456
    %v1458 = vand.u32 %v1457, 4294901760
    %1459 = vmatpush.msra.mxu0 %v1458
    %v1460 = vand.u32 %v1255, 4294901760
    %v1461 = vsub.f32 %v1255, %v1460
    %v1462 = vand.u32 %v1461, 4294901760
    %1463 = vmatpush.msra.mxu0 %v1462
    %v1464 = vand.u32 %v1254, 4294901760
    %v1465 = vsub.f32 %v1254, %v1464
    %v1466 = vand.u32 %v1465, 4294901760
    %1467 = vmatpush.msra.mxu0 %v1466
    %v1468 = vand.u32 %v1263, 4294901760
    %1469 = vmatmul.f32.gmra.mxu0 %v1468
    %v1470 = vpop.f32.mrf.mxu0
    %v1471 = vadd.f32 %v1426, %v1470
    %1472 = vdwg.mxu0
    %1473 = vmatpush.msra.mxu0 0.0
    %1474 = vmatpush.msra.mxu0 0.0
    %1475 = vmatpush.msra.mxu0 0.0
    %1476 = vmatpush.msra.mxu0 0.0
    %1477 = vmatpush.msra.mxu0 0.0
    %1478 = vmatpush.msra.mxu0 0.0
    %1479 = vmatpush.msra.mxu0 0.0
    %1480 = vmatpush.msra.mxu0 0.0
    %v1481 = vand.u32 %v1261, 4294901760
    %1482 = vmatpush.msra.mxu0 %v1481
    %v1483 = vand.u32 %v1260, 4294901760
    %1484 = vmatpush.msra.mxu0 %v1483
    %v1485 = vand.u32 %v1259, 4294901760
    %1486 = vmatpush.msra.mxu0 %v1485
    %v1487 = vand.u32 %v1258, 4294901760
    %1488 = vmatpush.msra.mxu0 %v1487
    %v1489 = vand.u32 %v1257, 4294901760
    %1490 = vmatpush.msra.mxu0 %v1489
    %v1491 = vand.u32 %v1256, 4294901760
    %1492 = vmatpush.msra.mxu0 %v1491
    %v1493 = vand.u32 %v1255, 4294901760
    %1494 = vmatpush.msra.mxu0 %v1493
    %v1495 = vand.u32 %v1254, 4294901760
    %1496 = vmatpush.msra.mxu0 %v1495
    %v1497 = vand.u32 %v1263, 4294901760
    %1498 = vmatmul.f32.gmra.mxu0 %v1497
    %v1499 = vpop.f32.mrf.mxu0
    %v1500 = vadd.f32 %v1471, %v1499
    %1501 = vdwg.mxu0
    %v1502 = vadd.f32 %v1247, %v1500
    %v1503 = vrot.slane %v666, 3
    %v1505 = vrot.slane %v735, 2
    %v1507 = vsel %vm740, %v1503, %v1505
    %s1508 = scalar_lea.vmem %s7, 192
    %v1509 = vld [vmem:[%s1508] sm:$0xff]
    %v1510 = vld [vmem:[%s1508 + $0x8] sm:$0xff]
    %v1511 = vld [vmem:[%s1508 + $0x10] sm:$0xff]
    %v1512 = vld [vmem:[%s1508 + $0x18] sm:$0xff]
    %v1513 = vld [vmem:[%s1508 + $0x20] sm:$0xff]
    %v1514 = vld [vmem:[%s1508 + $0x28] sm:$0xff]
    %v1515 = vld [vmem:[%s1508 + $0x30] sm:$0xff]
    %v1516 = vld [vmem:[%s1508 + $0x38] sm:$0xff]
    %v1518 = vsel %vm71, %v1507, 0
    %1520 = vmatpush.msra.mxu0 0.0
    %1521 = vmatpush.msra.mxu0 0.0
    %1522 = vmatpush.msra.mxu0 0.0
    %1523 = vmatpush.msra.mxu0 0.0
    %1524 = vmatpush.msra.mxu0 0.0
    %1525 = vmatpush.msra.mxu0 0.0
    %1526 = vmatpush.msra.mxu0 0.0
    %1527 = vmatpush.msra.mxu0 0.0
    %v1528 = vand.u32 %v1516, 4294901760
    %1529 = vmatpush.msra.mxu0 %v1528
    %v1530 = vand.u32 %v1515, 4294901760
    %1531 = vmatpush.msra.mxu0 %v1530
    %v1532 = vand.u32 %v1514, 4294901760
    %1533 = vmatpush.msra.mxu0 %v1532
    %v1534 = vand.u32 %v1513, 4294901760
    %1535 = vmatpush.msra.mxu0 %v1534
    %v1536 = vand.u32 %v1512, 4294901760
    %1537 = vmatpush.msra.mxu0 %v1536
    %v1538 = vand.u32 %v1511, 4294901760
    %1539 = vmatpush.msra.mxu0 %v1538
    %v1540 = vand.u32 %v1510, 4294901760
    %1541 = vmatpush.msra.mxu0 %v1540
    %v1542 = vand.u32 %v1509, 4294901760
    %1543 = vmatpush.msra.mxu0 %v1542
    %v1544 = vand.u32 %v1518, 4294901760
    %v1545 = vsub.f32 %v1518, %v1544
    %v1546 = vand.u32 %v1545, 4294901760
    %v1547 = vsub.f32 %v1545, %v1546
    %v1548 = vand.u32 %v1547, 4294901760
    %1549 = vmatmul.f32.gmra.mxu0 %v1548
    %v1550 = vpop.f32.mrf.mxu0
    %v1551 = vadd.f32 0.0, %v1550
    %1552 = vdwg.mxu0
    %1553 = vmatpush.msra.mxu0 0.0
    %1554 = vmatpush.msra.mxu0 0.0
    %1555 = vmatpush.msra.mxu0 0.0
    %1556 = vmatpush.msra.mxu0 0.0
    %1557 = vmatpush.msra.mxu0 0.0
    %1558 = vmatpush.msra.mxu0 0.0
    %1559 = vmatpush.msra.mxu0 0.0
    %1560 = vmatpush.msra.mxu0 0.0
    %v1561 = vand.u32 %v1516, 4294901760
    %v1562 = vsub.f32 %v1516, %v1561
    %v1563 = vand.u32 %v1562, 4294901760
    %v1564 = vsub.f32 %v1562, %v1563
    %v1565 = vand.u32 %v1564, 4294901760
    %1566 = vmatpush.msra.mxu0 %v1565
    %v1567 = vand.u32 %v1515, 4294901760
    %v1568 = vsub.f32 %v1515, %v1567
    %v1569 = vand.u32 %v1568, 4294901760
    %v1570 = vsub.f32 %v1568, %v1569
    %v1571 = vand.u32 %v1570, 4294901760
    %1572 = vmatpush.msra.mxu0 %v1571
    %v1573 = vand.u32 %v1514, 4294901760
    %v1574 = vsub.f32 %v1514, %v1573
    %v1575 = vand.u32 %v1574, 4294901760
    %v1576 = vsub.f32 %v1574, %v1575
    %v1577 = vand.u32 %v1576, 4294901760
    %1578 = vmatpush.msra.mxu0 %v1577
    %v1579 = vand.u32 %v1513, 4294901760
    %v1580 = vsub.f32 %v1513, %v1579
    %v1581 = vand.u32 %v1580, 4294901760
    %v1582 = vsub.f32 %v1580, %v1581
    %v1583 = vand.u32 %v1582, 4294901760
    %1584 = vmatpush.msra.mxu0 %v1583
    %v1585 = vand.u32 %v1512, 4294901760
    %v1586 = vsub.f32 %v1512, %v1585
    %v1587 = vand.u32 %v1586, 4294901760
    %v1588 = vsub.f32 %v1586, %v1587
    %v1589 = vand.u32 %v1588, 4294901760
    %1590 = vmatpush.msra.mxu0 %v1589
    %v1591 = vand.u32 %v1511, 4294901760
    %v1592 = vsub.f32 %v1511, %v1591
    %v1593 = vand.u32 %v1592, 4294901760
    %v1594 = vsub.f32 %v1592, %v1593
    %v1595 = vand.u32 %v1594, 4294901760
    %1596 = vmatpush.msra.mxu0 %v1595
    %v1597 = vand.u32 %v1510, 4294901760
    %v1598 = vsub.f32 %v1510, %v1597
    %v1599 = vand.u32 %v1598, 4294901760
    %v1600 = vsub.f32 %v1598, %v1599
    %v1601 = vand.u32 %v1600, 4294901760
    %1602 = vmatpush.msra.mxu0 %v1601
    %v1603 = vand.u32 %v1509, 4294901760
    %v1604 = vsub.f32 %v1509, %v1603
    %v1605 = vand.u32 %v1604, 4294901760
    %v1606 = vsub.f32 %v1604, %v1605
    %v1607 = vand.u32 %v1606, 4294901760
    %1608 = vmatpush.msra.mxu0 %v1607
    %v1609 = vand.u32 %v1518, 4294901760
    %1610 = vmatmul.f32.gmra.mxu0 %v1609
    %v1611 = vpop.f32.mrf.mxu0
    %v1612 = vadd.f32 %v1551, %v1611
    %1613 = vdwg.mxu0
    %1614 = vmatpush.msra.mxu0 0.0
    %1615 = vmatpush.msra.mxu0 0.0
    %1616 = vmatpush.msra.mxu0 0.0
    %1617 = vmatpush.msra.mxu0 0.0
    %1618 = vmatpush.msra.mxu0 0.0
    %1619 = vmatpush.msra.mxu0 0.0
    %1620 = vmatpush.msra.mxu0 0.0
    %1621 = vmatpush.msra.mxu0 0.0
    %v1622 = vand.u32 %v1516, 4294901760
    %v1623 = vsub.f32 %v1516, %v1622
    %1624 = vmatpush.msra.mxu0 %v1623
    %v1625 = vand.u32 %v1515, 4294901760
    %v1626 = vsub.f32 %v1515, %v1625
    %1627 = vmatpush.msra.mxu0 %v1626
    %v1628 = vand.u32 %v1514, 4294901760
    %v1629 = vsub.f32 %v1514, %v1628
    %1630 = vmatpush.msra.mxu0 %v1629
    %v1631 = vand.u32 %v1513, 4294901760
    %v1632 = vsub.f32 %v1513, %v1631
    %1633 = vmatpush.msra.mxu0 %v1632
    %v1634 = vand.u32 %v1512, 4294901760
    %v1635 = vsub.f32 %v1512, %v1634
    %1636 = vmatpush.msra.mxu0 %v1635
    %v1637 = vand.u32 %v1511, 4294901760
    %v1638 = vsub.f32 %v1511, %v1637
    %1639 = vmatpush.msra.mxu0 %v1638
    %v1640 = vand.u32 %v1510, 4294901760
    %v1641 = vsub.f32 %v1510, %v1640
    %1642 = vmatpush.msra.mxu0 %v1641
    %v1643 = vand.u32 %v1509, 4294901760
    %v1644 = vsub.f32 %v1509, %v1643
    %1645 = vmatpush.msra.mxu0 %v1644
    %v1646 = vand.u32 %v1518, 4294901760
    %v1647 = vsub.f32 %v1518, %v1646
    %1648 = vmatmul.f32.gmra.mxu0 %v1647
    %v1649 = vpop.f32.mrf.mxu0
    %v1650 = vadd.f32 %v1612, %v1649
    %1651 = vdwg.mxu0
    %1652 = vmatpush.msra.mxu0 0.0
    %1653 = vmatpush.msra.mxu0 0.0
    %1654 = vmatpush.msra.mxu0 0.0
    %1655 = vmatpush.msra.mxu0 0.0
    %1656 = vmatpush.msra.mxu0 0.0
    %1657 = vmatpush.msra.mxu0 0.0
    %1658 = vmatpush.msra.mxu0 0.0
    %1659 = vmatpush.msra.mxu0 0.0
    %v1660 = vand.u32 %v1516, 4294901760
    %1661 = vmatpush.msra.mxu0 %v1660
    %v1662 = vand.u32 %v1515, 4294901760
    %1663 = vmatpush.msra.mxu0 %v1662
    %v1664 = vand.u32 %v1514, 4294901760
    %1665 = vmatpush.msra.mxu0 %v1664
    %v1666 = vand.u32 %v1513, 4294901760
    %1667 = vmatpush.msra.mxu0 %v1666
    %v1668 = vand.u32 %v1512, 4294901760
    %1669 = vmatpush.msra.mxu0 %v1668
    %v1670 = vand.u32 %v1511, 4294901760
    %1671 = vmatpush.msra.mxu0 %v1670
    %v1672 = vand.u32 %v1510, 4294901760
    %1673 = vmatpush.msra.mxu0 %v1672
    %v1674 = vand.u32 %v1509, 4294901760
    %1675 = vmatpush.msra.mxu0 %v1674
    %v1676 = vand.u32 %v1518, 4294901760
    %v1677 = vsub.f32 %v1518, %v1676
    %v1678 = vand.u32 %v1677, 4294901760
    %1679 = vmatmul.f32.gmra.mxu0 %v1678
    %v1680 = vpop.f32.mrf.mxu0
    %v1681 = vadd.f32 %v1650, %v1680
    %1682 = vdwg.mxu0
    %1683 = vmatpush.msra.mxu0 0.0
    %1684 = vmatpush.msra.mxu0 0.0
    %1685 = vmatpush.msra.mxu0 0.0
    %1686 = vmatpush.msra.mxu0 0.0
    %1687 = vmatpush.msra.mxu0 0.0
    %1688 = vmatpush.msra.mxu0 0.0
    %1689 = vmatpush.msra.mxu0 0.0
    %1690 = vmatpush.msra.mxu0 0.0
    %v1691 = vand.u32 %v1516, 4294901760
    %v1692 = vsub.f32 %v1516, %v1691
    %v1693 = vand.u32 %v1692, 4294901760
    %1694 = vmatpush.msra.mxu0 %v1693
    %v1695 = vand.u32 %v1515, 4294901760
    %v1696 = vsub.f32 %v1515, %v1695
    %v1697 = vand.u32 %v1696, 4294901760
    %1698 = vmatpush.msra.mxu0 %v1697
    %v1699 = vand.u32 %v1514, 4294901760
    %v1700 = vsub.f32 %v1514, %v1699
    %v1701 = vand.u32 %v1700, 4294901760
    %1702 = vmatpush.msra.mxu0 %v1701
    %v1703 = vand.u32 %v1513, 4294901760
    %v1704 = vsub.f32 %v1513, %v1703
    %v1705 = vand.u32 %v1704, 4294901760
    %1706 = vmatpush.msra.mxu0 %v1705
    %v1707 = vand.u32 %v1512, 4294901760
    %v1708 = vsub.f32 %v1512, %v1707
    %v1709 = vand.u32 %v1708, 4294901760
    %1710 = vmatpush.msra.mxu0 %v1709
    %v1711 = vand.u32 %v1511, 4294901760
    %v1712 = vsub.f32 %v1511, %v1711
    %v1713 = vand.u32 %v1712, 4294901760
    %1714 = vmatpush.msra.mxu0 %v1713
    %v1715 = vand.u32 %v1510, 4294901760
    %v1716 = vsub.f32 %v1510, %v1715
    %v1717 = vand.u32 %v1716, 4294901760
    %1718 = vmatpush.msra.mxu0 %v1717
    %v1719 = vand.u32 %v1509, 4294901760
    %v1720 = vsub.f32 %v1509, %v1719
    %v1721 = vand.u32 %v1720, 4294901760
    %1722 = vmatpush.msra.mxu0 %v1721
    %v1723 = vand.u32 %v1518, 4294901760
    %1724 = vmatmul.f32.gmra.mxu0 %v1723
    %v1725 = vpop.f32.mrf.mxu0
    %v1726 = vadd.f32 %v1681, %v1725
    %1727 = vdwg.mxu0
    %1728 = vmatpush.msra.mxu0 0.0
    %1729 = vmatpush.msra.mxu0 0.0
    %1730 = vmatpush.msra.mxu0 0.0
    %1731 = vmatpush.msra.mxu0 0.0
    %1732 = vmatpush.msra.mxu0 0.0
    %1733 = vmatpush.msra.mxu0 0.0
    %1734 = vmatpush.msra.mxu0 0.0
    %1735 = vmatpush.msra.mxu0 0.0
    %v1736 = vand.u32 %v1516, 4294901760
    %1737 = vmatpush.msra.mxu0 %v1736
    %v1738 = vand.u32 %v1515, 4294901760
    %1739 = vmatpush.msra.mxu0 %v1738
    %v1740 = vand.u32 %v1514, 4294901760
    %1741 = vmatpush.msra.mxu0 %v1740
    %v1742 = vand.u32 %v1513, 4294901760
    %1743 = vmatpush.msra.mxu0 %v1742
    %v1744 = vand.u32 %v1512, 4294901760
    %1745 = vmatpush.msra.mxu0 %v1744
    %v1746 = vand.u32 %v1511, 4294901760
    %1747 = vmatpush.msra.mxu0 %v1746
    %v1748 = vand.u32 %v1510, 4294901760
    %1749 = vmatpush.msra.mxu0 %v1748
    %v1750 = vand.u32 %v1509, 4294901760
    %1751 = vmatpush.msra.mxu0 %v1750
    %v1752 = vand.u32 %v1518, 4294901760
    %1753 = vmatmul.f32.gmra.mxu0 %v1752
    %v1754 = vpop.f32.mrf.mxu0
    %v1755 = vadd.f32 %v1726, %v1754
    %1756 = vdwg.mxu0
    %v1757 = vadd.f32 %v1502, %v1755
    %v1758 = vmax.f32 %v1757, 0.0
    %v1759 = vld [vmem:[%s9] sm:$0xff]
    %v1760 = vld [vmem:[%s9 + $0x8] sm:$0xff]
    %v1761 = vld [vmem:[%s9 + $0x10] sm:$0xff]
    %v1762 = vld [vmem:[%s9 + $0x18] sm:$0xff]
    %v1763 = vld [vmem:[%s10] sm:$0x1]
    %v1765 = vperm.slane %v1763, 0
    %vm1767 = vcmask 261120
    %v1769 = vsel %vm1767, %v1758, 0
    %1771 = vmatpush.msra.mxu0 0.0
    %1772 = vmatpush.msra.mxu0 0.0
    %1773 = vmatpush.msra.mxu0 0.0
    %1774 = vmatpush.msra.mxu0 0.0
    %1775 = vmatpush.msra.mxu0 0.0
    %1776 = vmatpush.msra.mxu0 0.0
    %1777 = vmatpush.msra.mxu0 0.0
    %1778 = vmatpush.msra.mxu0 0.0
    %1779 = vmatpush.msra.mxu0 0.0
    %1780 = vmatpush.msra.mxu0 0.0
    %1781 = vmatpush.msra.mxu0 0.0
    %1782 = vmatpush.msra.mxu0 0.0
    %v1783 = vand.u32 %v1762, 4294901760
    %1784 = vmatpush.msra.mxu0 %v1783
    %v1785 = vand.u32 %v1761, 4294901760
    %1786 = vmatpush.msra.mxu0 %v1785
    %v1787 = vand.u32 %v1760, 4294901760
    %1788 = vmatpush.msra.mxu0 %v1787
    %v1789 = vand.u32 %v1759, 4294901760
    %1790 = vmatpush.msra.mxu0 %v1789
    %v1791 = vand.u32 %v1769, 4294901760
    %v1792 = vsub.f32 %v1769, %v1791
    %v1793 = vand.u32 %v1792, 4294901760
    %v1794 = vsub.f32 %v1792, %v1793
    %v1795 = vand.u32 %v1794, 4294901760
    %1796 = vmatmul.f32.gmra.mxu0 %v1795
    %v1797 = vpop.f32.mrf.mxu0
    %v1798 = vadd.f32 %v1765, %v1797
    %1799 = vdwg.mxu0
    %1800 = vmatpush.msra.mxu0 0.0
    %1801 = vmatpush.msra.mxu0 0.0
    %1802 = vmatpush.msra.mxu0 0.0
    %1803 = vmatpush.msra.mxu0 0.0
    %1804 = vmatpush.msra.mxu0 0.0
    %1805 = vmatpush.msra.mxu0 0.0
    %1806 = vmatpush.msra.mxu0 0.0
    %1807 = vmatpush.msra.mxu0 0.0
    %1808 = vmatpush.msra.mxu0 0.0
    %1809 = vmatpush.msra.mxu0 0.0
    %1810 = vmatpush.msra.mxu0 0.0
    %1811 = vmatpush.msra.mxu0 0.0
    %v1812 = vand.u32 %v1762, 4294901760
    %v1813 = vsub.f32 %v1762, %v1812
    %v1814 = vand.u32 %v1813, 4294901760
    %v1815 = vsub.f32 %v1813, %v1814
    %v1816 = vand.u32 %v1815, 4294901760
    %1817 = vmatpush.msra.mxu0 %v1816
    %v1818 = vand.u32 %v1761, 4294901760
    %v1819 = vsub.f32 %v1761, %v1818
    %v1820 = vand.u32 %v1819, 4294901760
    %v1821 = vsub.f32 %v1819, %v1820
    %v1822 = vand.u32 %v1821, 4294901760
    %1823 = vmatpush.msra.mxu0 %v1822
    %v1824 = vand.u32 %v1760, 4294901760
    %v1825 = vsub.f32 %v1760, %v1824
    %v1826 = vand.u32 %v1825, 4294901760
    %v1827 = vsub.f32 %v1825, %v1826
    %v1828 = vand.u32 %v1827, 4294901760
    %1829 = vmatpush.msra.mxu0 %v1828
    %v1830 = vand.u32 %v1759, 4294901760
    %v1831 = vsub.f32 %v1759, %v1830
    %v1832 = vand.u32 %v1831, 4294901760
    %v1833 = vsub.f32 %v1831, %v1832
    %v1834 = vand.u32 %v1833, 4294901760
    %1835 = vmatpush.msra.mxu0 %v1834
    %v1836 = vand.u32 %v1769, 4294901760
    %1837 = vmatmul.f32.gmra.mxu0 %v1836
    %v1838 = vpop.f32.mrf.mxu0
    %v1839 = vadd.f32 %v1798, %v1838
    %1840 = vdwg.mxu0
    %1841 = vmatpush.msra.mxu0 0.0
    %1842 = vmatpush.msra.mxu0 0.0
    %1843 = vmatpush.msra.mxu0 0.0
    %1844 = vmatpush.msra.mxu0 0.0
    %1845 = vmatpush.msra.mxu0 0.0
    %1846 = vmatpush.msra.mxu0 0.0
    %1847 = vmatpush.msra.mxu0 0.0
    %1848 = vmatpush.msra.mxu0 0.0
    %1849 = vmatpush.msra.mxu0 0.0
    %1850 = vmatpush.msra.mxu0 0.0
    %1851 = vmatpush.msra.mxu0 0.0
    %1852 = vmatpush.msra.mxu0 0.0
    %v1853 = vand.u32 %v1762, 4294901760
    %v1854 = vsub.f32 %v1762, %v1853
    %1855 = vmatpush.msra.mxu0 %v1854
    %v1856 = vand.u32 %v1761, 4294901760
    %v1857 = vsub.f32 %v1761, %v1856
    %1858 = vmatpush.msra.mxu0 %v1857
    %v1859 = vand.u32 %v1760, 4294901760
    %v1860 = vsub.f32 %v1760, %v1859
    %1861 = vmatpush.msra.mxu0 %v1860
    %v1862 = vand.u32 %v1759, 4294901760
    %v1863 = vsub.f32 %v1759, %v1862
    %1864 = vmatpush.msra.mxu0 %v1863
    %v1865 = vand.u32 %v1769, 4294901760
    %v1866 = vsub.f32 %v1769, %v1865
    %1867 = vmatmul.f32.gmra.mxu0 %v1866
    %v1868 = vpop.f32.mrf.mxu0
    %v1869 = vadd.f32 %v1839, %v1868
    %1870 = vdwg.mxu0
    %1871 = vmatpush.msra.mxu0 0.0
    %1872 = vmatpush.msra.mxu0 0.0
    %1873 = vmatpush.msra.mxu0 0.0
    %1874 = vmatpush.msra.mxu0 0.0
    %1875 = vmatpush.msra.mxu0 0.0
    %1876 = vmatpush.msra.mxu0 0.0
    %1877 = vmatpush.msra.mxu0 0.0
    %1878 = vmatpush.msra.mxu0 0.0
    %1879 = vmatpush.msra.mxu0 0.0
    %1880 = vmatpush.msra.mxu0 0.0
    %1881 = vmatpush.msra.mxu0 0.0
    %1882 = vmatpush.msra.mxu0 0.0
    %v1883 = vand.u32 %v1762, 4294901760
    %1884 = vmatpush.msra.mxu0 %v1883
    %v1885 = vand.u32 %v1761, 4294901760
    %1886 = vmatpush.msra.mxu0 %v1885
    %v1887 = vand.u32 %v1760, 4294901760
    %1888 = vmatpush.msra.mxu0 %v1887
    %v1889 = vand.u32 %v1759, 4294901760
    %1890 = vmatpush.msra.mxu0 %v1889
    %v1891 = vand.u32 %v1769, 4294901760
    %v1892 = vsub.f32 %v1769, %v1891
    %v1893 = vand.u32 %v1892, 4294901760
    %1894 = vmatmul.f32.gmra.mxu0 %v1893
    %v1895 = vpop.f32.mrf.mxu0
    %v1896 = vadd.f32 %v1869, %v1895
    %1897 = vdwg.mxu0
    %1898 = vmatpush.msra.mxu0 0.0
    %1899 = vmatpush.msra.mxu0 0.0
    %1900 = vmatpush.msra.mxu0 0.0
    %1901 = vmatpush.msra.mxu0 0.0
    %1902 = vmatpush.msra.mxu0 0.0
    %1903 = vmatpush.msra.mxu0 0.0
    %1904 = vmatpush.msra.mxu0 0.0
    %1905 = vmatpush.msra.mxu0 0.0
    %1906 = vmatpush.msra.mxu0 0.0
    %1907 = vmatpush.msra.mxu0 0.0
    %1908 = vmatpush.msra.mxu0 0.0
    %1909 = vmatpush.msra.mxu0 0.0
    %v1910 = vand.u32 %v1762, 4294901760
    %v1911 = vsub.f32 %v1762, %v1910
    %v1912 = vand.u32 %v1911, 4294901760
    %1913 = vmatpush.msra.mxu0 %v1912
    %v1914 = vand.u32 %v1761, 4294901760
    %v1915 = vsub.f32 %v1761, %v1914
    %v1916 = vand.u32 %v1915, 4294901760
    %1917 = vmatpush.msra.mxu0 %v1916
    %v1918 = vand.u32 %v1760, 4294901760
    %v1919 = vsub.f32 %v1760, %v1918
    %v1920 = vand.u32 %v1919, 4294901760
    %1921 = vmatpush.msra.mxu0 %v1920
    %v1922 = vand.u32 %v1759, 4294901760
    %v1923 = vsub.f32 %v1759, %v1922
    %v1924 = vand.u32 %v1923, 4294901760
    %1925 = vmatpush.msra.mxu0 %v1924
    %v1926 = vand.u32 %v1769, 4294901760
    %1927 = vmatmul.f32.gmra.mxu0 %v1926
    %v1928 = vpop.f32.mrf.mxu0
    %v1929 = vadd.f32 %v1896, %v1928
    %1930 = vdwg.mxu0
    %1931 = vmatpush.msra.mxu0 0.0
    %1932 = vmatpush.msra.mxu0 0.0
    %1933 = vmatpush.msra.mxu0 0.0
    %1934 = vmatpush.msra.mxu0 0.0
    %1935 = vmatpush.msra.mxu0 0.0
    %1936 = vmatpush.msra.mxu0 0.0
    %1937 = vmatpush.msra.mxu0 0.0
    %1938 = vmatpush.msra.mxu0 0.0
    %1939 = vmatpush.msra.mxu0 0.0
    %1940 = vmatpush.msra.mxu0 0.0
    %1941 = vmatpush.msra.mxu0 0.0
    %1942 = vmatpush.msra.mxu0 0.0
    %v1943 = vand.u32 %v1762, 4294901760
    %1944 = vmatpush.msra.mxu0 %v1943
    %v1945 = vand.u32 %v1761, 4294901760
    %1946 = vmatpush.msra.mxu0 %v1945
    %v1947 = vand.u32 %v1760, 4294901760
    %1948 = vmatpush.msra.mxu0 %v1947
    %v1949 = vand.u32 %v1759, 4294901760
    %1950 = vmatpush.msra.mxu0 %v1949
    %v1951 = vand.u32 %v1769, 4294901760
    %1952 = vmatmul.f32.gmra.mxu0 %v1951
    %v1953 = vpop.f32.mrf.mxu0
    %v1954 = vadd.f32 %v1929, %v1953
    %1955 = vdwg.mxu0
    %vm1956 = vcmask 74752
    %1957 = vst.msk [vmem:[#allocation4] sm:$0x3] %vm1956, %v1954
    // Predicated region
    $region46: #{_fused_forward_impl.1} parent=1 // pred_check
      _
    $region47: #{_fused_forward_impl.1} parent=1 // pred_check_branch
      %1959 = sbr.rel (0) target = $region49
    $region48: #{_fused_forward_impl.1} parent=1 // pred_region
      %1961 = vsyncadd [#allocation5], 0
      %s1963 = sshll.u32 [#allocation4], 4
      %s1964 = int_to_ptr.vmem [resolvable:$true] %s1963
      %s1965 = sshll.u32 %s11, 4
      %s1966 = int_to_ptr.hbm [resolvable:$true] %s1965
      %1968 = dma.vmem_to_hbm [thread:$0]  %s1964, 32, %s1966, [#allocation5]
    $region49: #{_fused_forward_impl.1} parent=1 // pred_fallthru
      _
    // Predicated region
    $region50: #{_fused_forward_impl.1} parent=1 // pred_check
      _
    $region51: #{_fused_forward_impl.1} parent=1 // pred_check_branch
      %1970 = sbr.rel (0) target = $region53
    $region52: #{_fused_forward_impl.1} parent=1 // pred_region
      %1972 = dma.done [#allocation5], 32
    $region53: #{_fused_forward_impl.1} parent=1 // pred_fallthru
      _
    %1973 = vsyncpa [#allocation5], 1

</llo_original>
